<compile_context>
chip_gen: v7x
topology: tpu7x:2x2x1
jax: 0.10.0
libtpu: 0.0.40
codegen_flags: <defaults>
</compile_context>

<pallas_src>
import math

import jax
import jax.numpy as jnp
from jax.experimental import pallas as pl
from jax.experimental.pallas import tpu as pltpu

EMBED_DIM = 32
HIDDEN_DIM = 128
NUM_HEADS = 16
HEAD_DIM = EMBED_DIM // NUM_HEADS
LN_EPS = 1e-5


def _layernorm(x, gamma, beta):
    mu = jnp.mean(x, axis=-1, keepdims=True)
    var = jnp.mean((x - mu) ** 2, axis=-1, keepdims=True)
    return (x - mu) * jax.lax.rsqrt(var + LN_EPS) * gamma + beta


def _gelu_exact(x):
    # PyTorch nn.GELU() default: exact erf formulation.
    return 0.5 * x * (1.0 + jax.lax.erf(x * (1.0 / math.sqrt(2.0))))


def transformer_block_kernel(x_ref, w_ref, o_ref):
    Bt, S, E = x_ref.shape
    H, D, F = NUM_HEADS, HEAD_DIM, HIDDEN_DIM

    # ---- static row offsets into the single packed (R, 128) weight buffer ----
    r_wqkv = 0
    r_wo = r_wqkv + E
    r_w1 = r_wo + E
    r_w2 = r_w1 + E
    r_p = r_w2 + F
    r_m = r_p + 8

    wqkv = w_ref[r_wqkv:r_wo, :]                 # (E, 128); lanes 96:128 zero-padded
    wo = w_ref[r_wo:r_w1, 0:E]                   # (E, E)
    w1 = w_ref[r_w1:r_w2, :]                     # (E, F)
    w2 = w_ref[r_w2:r_p, 0:E]                    # (F, E)
    p = w_ref[r_p:r_m, :]                        # (8, 128) small-param page
    head_mask = w_ref[r_m:r_m + H * S, 0:E]      # (H*S, E) block-diagonal 0/1 mask

    b_qkv = p[0:1, :]                            # (1, 128); lanes 96:128 zero
    b1 = p[1:2, :]                               # (1, 128)
    b_o = p[2:3, 0:E]
    g1 = p[3:4, 0:E]
    be1 = p[4:5, 0:E]
    g2 = p[5:6, 0:E]
    be2 = p[6:7, 0:E]
    b2 = p[7:8, 0:E]

    x = x_ref[...].astype(jnp.float32).reshape(Bt * S, E)        # (Bt*S, E)

    # ---- fused Q/K/V projection over the whole batch block (one MXU op) ------
    qkv = jnp.dot(x, wqkv, preferred_element_type=jnp.float32) + b_qkv   # (Bt*S, 128)
    q = qkv[:, 0:E] * (1.0 / math.sqrt(float(D)))   # fold softmax scale into q once
    k = qkv[:, E:2 * E]
    v = qkv[:, 2 * E:3 * E]

    # ---- attention: K/V sublane-stacked, scores = one dense (S, H*S) tile ----
    attn_parts = []
    for b in range(Bt):                              # tiny static loop over batch items
        lo, hi = b * S, (b + 1) * S
        q_b = q[lo:hi, :]                                                # (S, E)
        k_stack = (jnp.broadcast_to(k[lo:hi, :][None], (H, S, E))
                   .reshape(H * S, E) * head_mask)                       # (H*S, E)
        v_stack = (jnp.broadcast_to(v[lo:hi, :][None], (H, S, E))
                   .reshape(H * S, E) * head_mask)                       # (H*S, E)

        # All heads' scores with ONE matmul: (S, E) x (H*S, E)^T -> (S, H*S).
        scores = jax.lax.dot_general(q_b, k_stack, (((1,), (1,)), ((), ())),
                                     preferred_element_type=jnp.float32)
        # Global row max >= each head's segment max -> exact and numerically stable.
        pexp = jnp.exp(scores - jnp.max(scores, axis=-1, keepdims=True))

        # Per-head segmented denominator and context, both on the MXU.
        denom = jnp.dot(pexp, head_mask, preferred_element_type=jnp.float32)  # (S, E)
        ctx = jnp.dot(pexp, v_stack, preferred_element_type=jnp.float32)      # (S, E)
        attn_parts.append(ctx / denom)         # == per-head attention outputs, head-concat

    attn = attn_parts[0] if Bt == 1 else jnp.concatenate(attn_parts, axis=0)
    attn_out = jnp.dot(attn, wo, preferred_element_type=jnp.float32) + b_o

    # ---- residual + LayerNorm 1 (dropout = identity, eval mode) --------------
    xn1 = _layernorm(x + attn_out, g1, be1)

    # ---- FeedForward ----------------------------------------------------------
    h1 = jnp.dot(xn1, w1, preferred_element_type=jnp.float32) + b1
    ff = jnp.dot(_gelu_exact(h1), w2, preferred_element_type=jnp.float32) + b2

    # ---- residual + LayerNorm 2 -----------------------------------------------
    out = _layernorm(xn1 + ff, g2, be2)
    o_ref[...] = out.reshape(Bt, S, E).astype(o_ref.dtype)


def _default_batch_block(B):
    """Whole batch per grid step on single-TC chips; 2-way split on dual-TC v7x."""
    try:
        kind = jax.devices()[0].device_kind.lower()
        if ("v7" in kind or "7x" in kind) and B >= 2:
            return pl.cdiv(B, 2)
    except Exception:
        pass
    return B


def transformer_block(x, wbuf, *, batch_block=None):
    B, S, E = x.shape
    assert E == EMBED_DIM
    if batch_block is None or batch_block <= 0 or B % batch_block != 0:
        batch_block = B
    grid_b = B // batch_block

    return pl.pallas_call(
        transformer_block_kernel,
        out_shape=jax.ShapeDtypeStruct((B, S, E), x.dtype),
        grid_spec=pltpu.PrefetchScalarGridSpec(
            num_scalar_prefetch=0,
            grid=(grid_b,),
            in_specs=[
                pl.BlockSpec((batch_block, S, E), lambda b: (b, 0, 0)),
                pl.BlockSpec(wbuf.shape, lambda b: (0, 0)),
            ],
            out_specs=pl.BlockSpec((batch_block, S, E), lambda b: (b, 0, 0)),
        ),
        compiler_params=pltpu.CompilerParams(dimension_semantics=("parallel",)),
    )(x, wbuf)


def make_params(key):
    """Deterministic synthetic parameters (PyTorch nn.Linear-like scales)."""
    keys = jax.random.split(key, 6)

    def lin(k, fan_in, fan_out):
        # weight stored as (in, out) == W^T of PyTorch's (out, in)
        lim = 1.0 / math.sqrt(fan_in)
        kw, kb = jax.random.split(k)
        w = jax.random.uniform(kw, (fan_in, fan_out), jnp.float32, -lim, lim)
        b = jax.random.uniform(kb, (fan_out,), jnp.float32, -lim, lim)
        return w, b

    wq, bq = lin(keys[0], EMBED_DIM, EMBED_DIM)
    wk, bk = lin(keys[1], EMBED_DIM, EMBED_DIM)
    wv, bv = lin(keys[2], EMBED_DIM, EMBED_DIM)
    wo, bo = lin(keys[3], EMBED_DIM, EMBED_DIM)
    w1, b1 = lin(keys[4], EMBED_DIM, HIDDEN_DIM)
    w2, b2 = lin(keys[5], HIDDEN_DIM, EMBED_DIM)
    return {
        "wq": wq, "bq": bq, "wk": wk, "bk": bk, "wv": wv, "bv": bv,
        "wo": wo, "bo": bo, "w1": w1, "b1": b1, "w2": w2, "b2": b2,
        "g1": jnp.ones((EMBED_DIM,), jnp.float32),
        "be1": jnp.zeros((EMBED_DIM,), jnp.float32),
        "g2": jnp.ones((EMBED_DIM,), jnp.float32),
        "be2": jnp.zeros((EMBED_DIM,), jnp.float32),
    }


def pack_params(p, seq_len):
    """Pack every parameter + the block-diagonal head mask into one (R, 128) buffer."""
    E, F, H, S = EMBED_DIM, HIDDEN_DIM, NUM_HEADS, seq_len
    rows = E + E + E + F + 8 + H * S
    rows = ((rows + 7) // 8) * 8                       # keep sublane-aligned
    buf = jnp.zeros((rows, 128), jnp.float32)

    r = 0
    wqkv = jnp.concatenate([p["wq"], p["wk"], p["wv"]], axis=1)          # (E, 3E)
    buf = buf.at[r:r + E, 0:3 * E].set(wqkv); r += E
    buf = buf.at[r:r + E, 0:E].set(p["wo"]); r += E
    buf = buf.at[r:r + E, :].set(p["w1"]); r += E
    buf = buf.at[r:r + F, 0:E].set(p["w2"]); r += F

    small = jnp.zeros((8, 128), jnp.float32)
    small = small.at[0, 0:3 * E].set(jnp.concatenate([p["bq"], p["bk"], p["bv"]]))
    small = small.at[1, 0:F].set(p["b1"])
    small = small.at[2, 0:E].set(p["bo"])
    small = small.at[3, 0:E].set(p["g1"])
    small = small.at[4, 0:E].set(p["be1"])
    small = small.at[5, 0:E].set(p["g2"])
    small = small.at[6, 0:E].set(p["be2"])
    small = small.at[7, 0:E].set(p["b2"])
    buf = buf.at[r:r + 8, :].set(small); r += 8

    # Block-diagonal head mask: row h*S + t keeps head h's HEAD_DIM lanes.
    row = jnp.arange(H * S)[:, None]
    col = jnp.arange(E)[None, :]
    mask = ((row // S) == (col // HEAD_DIM)).astype(jnp.float32)
    buf = buf.at[r:r + H * S, 0:E].set(mask)
    return buf


def reference_transformer_block(x, p):
    """Pure-JAX reference mirroring the PyTorch forward (eval mode)."""
    x = x.astype(jnp.float32)

    def mha(x):
        B, S, E = x.shape
        q = x @ p["wq"] + p["bq"]
        k = x @ p["wk"] + p["bk"]
        v = x @ p["wv"] + p["bv"]

        def split(t):
            return t.reshape(B, S, NUM_HEADS, HEAD_DIM).transpose(0, 2, 1, 3)

        Q, K, V = split(q), split(k), split(v)
        scores = jnp.einsum("bhsd,bhtd->bhst", Q, K) / math.sqrt(float(HEAD_DIM))
        w = jax.nn.softmax(scores, axis=-1)
        o = jnp.einsum("bhst,bhtd->bhsd", w, V)
        o = o.transpose(0, 2, 1, 3).reshape(B, S, E)
        return o @ p["wo"] + p["bo"]

    def ln(x, g, b):
        mu = jnp.mean(x, -1, keepdims=True)
        var = jnp.mean((x - mu) ** 2, -1, keepdims=True)
        return (x - mu) / jnp.sqrt(var + LN_EPS) * g + b

    with jax.default_matmul_precision("highest"):
        x1 = ln(x + mha(x), p["g1"], p["be1"])
        h = _gelu_exact(x1 @ p["w1"] + p["b1"])
        ff = h @ p["w2"] + p["b2"]
        return ln(x1 + ff, p["g2"], p["be2"])


if __name__ == "__main__":
    key = jax.random.PRNGKey(0)
    kx, kp = jax.random.split(key)

    B, S = 2, 8
    x = jax.random.normal(kx, (B, S, EMBED_DIM), jnp.float32)
    raw = make_params(kp)
    wbuf = pack_params(raw, S)

    bb = _default_batch_block(B)
    out = jax.block_until_ready(transformer_block(x, wbuf, batch_block=bb))

    ref = reference_transformer_block(x, raw)
    assert out.shape == (B, S, EMBED_DIM)
    err = jnp.max(jnp.abs(out - ref))
    assert jnp.allclose(out, ref, atol=2e-5, rtol=2e-5), f"max abs err = {err}"
    print("KERNEL_OK")
</pallas_src>

<mosaic_0001>
module attributes {stable_mosaic.version = 11 : i64} {
  func.func @transformer_block_kernel(%arg0: i32, %arg1: memref<2x8x32xf32, #tpu.memory_space<vmem>>, %arg2: memref<360x128xf32, #tpu.memory_space<vmem>>, %arg3: memref<2x8x32xf32, #tpu.memory_space<vmem>>) attributes {dimension_semantics = [#tpu.dimension_semantics<parallel>], iteration_bounds = array<i64: 1>, scalar_prefetch = 0 : i64, scratch_operands = 0 : i64, tpu.core_type = #tpu.core_type<tc>, window_params = [{transform_indices = @transform_0, window_bounds = array<i64: 2, 8, 32>}, {pipeline_mode = #tpu.pipeline_mode<synchronous>, transform_indices = @transform_1, window_bounds = array<i64: 360, 128>}, {transform_indices = @transform_2, window_bounds = array<i64: 2, 8, 32>}]} {
    %c0 = arith.constant 0 : index
    %c0_0 = arith.constant 0 : index
    %0 = vector.load %arg2[%c0, %c0_0] : memref<360x128xf32, #tpu.memory_space<vmem>>, vector<32x128xf32>
    %c32 = arith.constant 32 : index
    %c0_1 = arith.constant 0 : index
    %1 = vector.load %arg2[%c32, %c0_1] : memref<360x128xf32, #tpu.memory_space<vmem>>, vector<32x32xf32>
    %c64 = arith.constant 64 : index
    %c0_2 = arith.constant 0 : index
    %2 = vector.load %arg2[%c64, %c0_2] : memref<360x128xf32, #tpu.memory_space<vmem>>, vector<32x128xf32>
    %c96 = arith.constant 96 : index
    %c0_3 = arith.constant 0 : index
    %3 = vector.load %arg2[%c96, %c0_3] : memref<360x128xf32, #tpu.memory_space<vmem>>, vector<128x32xf32>
    %c224 = arith.constant 224 : index
    %c0_4 = arith.constant 0 : index
    %4 = vector.load %arg2[%c224, %c0_4] : memref<360x128xf32, #tpu.memory_space<vmem>>, vector<8x128xf32>
    %c232 = arith.constant 232 : index
    %c0_5 = arith.constant 0 : index
    %5 = vector.load %arg2[%c232, %c0_5] : memref<360x128xf32, #tpu.memory_space<vmem>>, vector<128x32xf32>
    %6 = vector.extract_strided_slice %4 {offsets = [0, 0], sizes = [1, 128], strides = [1, 1]} : vector<8x128xf32> to vector<1x128xf32>
    %7 = vector.extract_strided_slice %4 {offsets = [1, 0], sizes = [1, 128], strides = [1, 1]} : vector<8x128xf32> to vector<1x128xf32>
    %8 = vector.extract_strided_slice %4 {offsets = [2, 0], sizes = [1, 32], strides = [1, 1]} : vector<8x128xf32> to vector<1x32xf32>
    %9 = vector.extract_strided_slice %4 {offsets = [3, 0], sizes = [1, 32], strides = [1, 1]} : vector<8x128xf32> to vector<1x32xf32>
    %10 = vector.extract_strided_slice %4 {offsets = [4, 0], sizes = [1, 32], strides = [1, 1]} : vector<8x128xf32> to vector<1x32xf32>
    %11 = vector.extract_strided_slice %4 {offsets = [5, 0], sizes = [1, 32], strides = [1, 1]} : vector<8x128xf32> to vector<1x32xf32>
    %12 = vector.extract_strided_slice %4 {offsets = [6, 0], sizes = [1, 32], strides = [1, 1]} : vector<8x128xf32> to vector<1x32xf32>
    %13 = vector.extract_strided_slice %4 {offsets = [7, 0], sizes = [1, 32], strides = [1, 1]} : vector<8x128xf32> to vector<1x32xf32>
    %c0_6 = arith.constant 0 : index
    %c0_7 = arith.constant 0 : index
    %c0_8 = arith.constant 0 : index
    %14 = vector.load %arg1[%c0_6, %c0_7, %c0_8] : memref<2x8x32xf32, #tpu.memory_space<vmem>>, vector<2x8x32xf32>
    %15 = vector.shape_cast %14 : vector<2x8x32xf32> to vector<16x32xf32>
    %cst = arith.constant dense<0.000000e+00> : vector<16x128xf32>
    %16 = tpu.matmul %15, %0, %cst {dimension_numbers = #tpu.dot_dimension_numbers<[1], [0], [0], [1], [0, 0, 1, 1], [], []>} : vector<16x32xf32>, vector<32x128xf32>, vector<16x128xf32> -> vector<16x128xf32>
    %17 = vector.broadcast %6 : vector<1x128xf32> to vector<16x128xf32>
    %18 = arith.addf %16, %17 : vector<16x128xf32>
    %19 = vector.extract_strided_slice %18 {offsets = [0, 0], sizes = [16, 32], strides = [1, 1]} : vector<16x128xf32> to vector<16x32xf32>
    %cst_9 = arith.constant 0.707106769 : f32
    %20 = vector.broadcast %cst_9 : f32 to vector<16x32xf32>
    %21 = arith.mulf %19, %20 : vector<16x32xf32>
    %22 = vector.extract_strided_slice %18 {offsets = [0, 32], sizes = [16, 32], strides = [1, 1]} : vector<16x128xf32> to vector<16x32xf32>
    %23 = vector.extract_strided_slice %18 {offsets = [0, 64], sizes = [16, 32], strides = [1, 1]} : vector<16x128xf32> to vector<16x32xf32>
    %24 = vector.extract_strided_slice %21 {offsets = [0, 0], sizes = [8, 32], strides = [1, 1]} : vector<16x32xf32> to vector<8x32xf32>
    %25 = vector.extract_strided_slice %22 {offsets = [0, 0], sizes = [8, 32], strides = [1, 1]} : vector<16x32xf32> to vector<8x32xf32>
    %26 = vector.shape_cast %25 : vector<8x32xf32> to vector<1x8x32xf32>
    %27 = vector.shape_cast %26 : vector<1x8x32xf32> to vector<1x8x32xf32>
    %28 = vector.broadcast %27 : vector<1x8x32xf32> to vector<16x8x32xf32>
    %29 = vector.shape_cast %28 : vector<16x8x32xf32> to vector<128x32xf32>
    %30 = arith.mulf %29, %5 : vector<128x32xf32>
    %31 = vector.extract_strided_slice %23 {offsets = [0, 0], sizes = [8, 32], strides = [1, 1]} : vector<16x32xf32> to vector<8x32xf32>
    %32 = vector.shape_cast %31 : vector<8x32xf32> to vector<1x8x32xf32>
    %33 = vector.shape_cast %32 : vector<1x8x32xf32> to vector<1x8x32xf32>
    %34 = vector.broadcast %33 : vector<1x8x32xf32> to vector<16x8x32xf32>
    %35 = vector.shape_cast %34 : vector<16x8x32xf32> to vector<128x32xf32>
    %36 = arith.mulf %35, %5 : vector<128x32xf32>
    %cst_10 = arith.constant dense<0.000000e+00> : vector<8x128xf32>
    %37 = tpu.matmul %24, %30, %cst_10 {dimension_numbers = #tpu.dot_dimension_numbers<[1], [1], [0], [0], [0, 0, 1, 0], [], []>} : vector<8x32xf32>, vector<128x32xf32>, vector<8x128xf32> -> vector<8x128xf32>
    %cst_11 = arith.constant dense<0xFF800000> : vector<8xf32>
    %38 = vector.multi_reduction <maximumf>, %37, %cst_11 [1] : vector<8x128xf32> to vector<8xf32>
    %39 = vector.shape_cast %38 : vector<8xf32> to vector<8x1xf32>
    %40 = vector.broadcast %39 : vector<8x1xf32> to vector<8x128xf32>
    %41 = arith.subf %37, %40 : vector<8x128xf32>
    %42 = math.exp %41 : vector<8x128xf32>
    %cst_12 = arith.constant dense<0.000000e+00> : vector<8x32xf32>
    %43 = tpu.matmul %42, %5, %cst_12 {dimension_numbers = #tpu.dot_dimension_numbers<[1], [0], [0], [1], [0, 0, 1, 1], [], []>} : vector<8x128xf32>, vector<128x32xf32>, vector<8x32xf32> -> vector<8x32xf32>
    %cst_13 = arith.constant dense<0.000000e+00> : vector<8x32xf32>
    %44 = tpu.matmul %42, %36, %cst_13 {dimension_numbers = #tpu.dot_dimension_numbers<[1], [0], [0], [1], [0, 0, 1, 1], [], []>} : vector<8x128xf32>, vector<128x32xf32>, vector<8x32xf32> -> vector<8x32xf32>
    %45 = arith.divf %44, %43 : vector<8x32xf32>
    %46 = vector.extract_strided_slice %21 {offsets = [8, 0], sizes = [8, 32], strides = [1, 1]} : vector<16x32xf32> to vector<8x32xf32>
    %47 = vector.extract_strided_slice %22 {offsets = [8, 0], sizes = [8, 32], strides = [1, 1]} : vector<16x32xf32> to vector<8x32xf32>
    %48 = vector.shape_cast %47 : vector<8x32xf32> to vector<1x8x32xf32>
    %49 = vector.shape_cast %48 : vector<1x8x32xf32> to vector<1x8x32xf32>
    %50 = vector.broadcast %49 : vector<1x8x32xf32> to vector<16x8x32xf32>
    %51 = vector.shape_cast %50 : vector<16x8x32xf32> to vector<128x32xf32>
    %52 = arith.mulf %51, %5 : vector<128x32xf32>
    %53 = vector.extract_strided_slice %23 {offsets = [8, 0], sizes = [8, 32], strides = [1, 1]} : vector<16x32xf32> to vector<8x32xf32>
    %54 = vector.shape_cast %53 : vector<8x32xf32> to vector<1x8x32xf32>
    %55 = vector.shape_cast %54 : vector<1x8x32xf32> to vector<1x8x32xf32>
    %56 = vector.broadcast %55 : vector<1x8x32xf32> to vector<16x8x32xf32>
    %57 = vector.shape_cast %56 : vector<16x8x32xf32> to vector<128x32xf32>
    %58 = arith.mulf %57, %5 : vector<128x32xf32>
    %cst_14 = arith.constant dense<0.000000e+00> : vector<8x128xf32>
    %59 = tpu.matmul %46, %52, %cst_14 {dimension_numbers = #tpu.dot_dimension_numbers<[1], [1], [0], [0], [0, 0, 1, 0], [], []>} : vector<8x32xf32>, vector<128x32xf32>, vector<8x128xf32> -> vector<8x128xf32>
    %cst_15 = arith.constant dense<0xFF800000> : vector<8xf32>
    %60 = vector.multi_reduction <maximumf>, %59, %cst_15 [1] : vector<8x128xf32> to vector<8xf32>
    %61 = vector.shape_cast %60 : vector<8xf32> to vector<8x1xf32>
    %62 = vector.broadcast %61 : vector<8x1xf32> to vector<8x128xf32>
    %63 = arith.subf %59, %62 : vector<8x128xf32>
    %64 = math.exp %63 : vector<8x128xf32>
    %cst_16 = arith.constant dense<0.000000e+00> : vector<8x32xf32>
    %65 = tpu.matmul %64, %5, %cst_16 {dimension_numbers = #tpu.dot_dimension_numbers<[1], [0], [0], [1], [0, 0, 1, 1], [], []>} : vector<8x128xf32>, vector<128x32xf32>, vector<8x32xf32> -> vector<8x32xf32>
    %cst_17 = arith.constant dense<0.000000e+00> : vector<8x32xf32>
    %66 = tpu.matmul %64, %58, %cst_17 {dimension_numbers = #tpu.dot_dimension_numbers<[1], [0], [0], [1], [0, 0, 1, 1], [], []>} : vector<8x128xf32>, vector<128x32xf32>, vector<8x32xf32> -> vector<8x32xf32>
    %67 = arith.divf %66, %65 : vector<8x32xf32>
    %68 = tpu.concatenate %45, %67 in 0 : vector<8x32xf32>, vector<8x32xf32> -> vector<16x32xf32>
    %cst_18 = arith.constant dense<0.000000e+00> : vector<16x32xf32>
    %69 = tpu.matmul %68, %1, %cst_18 {dimension_numbers = #tpu.dot_dimension_numbers<[1], [0], [0], [1], [0, 0, 1, 1], [], []>} : vector<16x32xf32>, vector<32x32xf32>, vector<16x32xf32> -> vector<16x32xf32>
    %70 = vector.broadcast %8 : vector<1x32xf32> to vector<16x32xf32>
    %71 = arith.addf %69, %70 : vector<16x32xf32>
    %72 = arith.addf %15, %71 : vector<16x32xf32>
    %cst_19 = arith.constant dense<0.000000e+00> : vector<16xf32>
    %73 = vector.multi_reduction <add>, %72, %cst_19 [1] : vector<16x32xf32> to vector<16xf32>
    %74 = vector.shape_cast %73 : vector<16xf32> to vector<16x1xf32>
    %cst_20 = arith.constant 3.200000e+01 : f32
    %75 = vector.broadcast %cst_20 : f32 to vector<16x1xf32>
    %76 = arith.divf %74, %75 : vector<16x1xf32>
    %77 = vector.broadcast %76 : vector<16x1xf32> to vector<16x32xf32>
    %78 = arith.subf %72, %77 : vector<16x32xf32>
    %79 = arith.mulf %78, %78 : vector<16x32xf32>
    %cst_21 = arith.constant dense<0.000000e+00> : vector<16xf32>
    %80 = vector.multi_reduction <add>, %79, %cst_21 [1] : vector<16x32xf32> to vector<16xf32>
    %81 = vector.shape_cast %80 : vector<16xf32> to vector<16x1xf32>
    %cst_22 = arith.constant 3.200000e+01 : f32
    %82 = vector.broadcast %cst_22 : f32 to vector<16x1xf32>
    %83 = arith.divf %81, %82 : vector<16x1xf32>
    %84 = vector.broadcast %76 : vector<16x1xf32> to vector<16x32xf32>
    %85 = arith.subf %72, %84 : vector<16x32xf32>
    %cst_23 = arith.constant 9.99999974E-6 : f32
    %86 = vector.broadcast %cst_23 : f32 to vector<16x1xf32>
    %87 = arith.addf %83, %86 : vector<16x1xf32>
    %88 = math.rsqrt %87 : vector<16x1xf32>
    %89 = vector.broadcast %88 : vector<16x1xf32> to vector<16x32xf32>
    %90 = arith.mulf %85, %89 : vector<16x32xf32>
    %91 = vector.broadcast %9 : vector<1x32xf32> to vector<16x32xf32>
    %92 = arith.mulf %90, %91 : vector<16x32xf32>
    %93 = vector.broadcast %10 : vector<1x32xf32> to vector<16x32xf32>
    %94 = arith.addf %92, %93 : vector<16x32xf32>
    %cst_24 = arith.constant dense<0.000000e+00> : vector<16x128xf32>
    %95 = tpu.matmul %94, %2, %cst_24 {dimension_numbers = #tpu.dot_dimension_numbers<[1], [0], [0], [1], [0, 0, 1, 1], [], []>} : vector<16x32xf32>, vector<32x128xf32>, vector<16x128xf32> -> vector<16x128xf32>
    %96 = vector.broadcast %7 : vector<1x128xf32> to vector<16x128xf32>
    %97 = arith.addf %95, %96 : vector<16x128xf32>
    %cst_25 = arith.constant 5.000000e-01 : f32
    %98 = vector.broadcast %cst_25 : f32 to vector<16x128xf32>
    %99 = arith.mulf %98, %97 : vector<16x128xf32>
    %cst_26 = arith.constant 0.707106769 : f32
    %100 = vector.broadcast %cst_26 : f32 to vector<16x128xf32>
    %101 = arith.mulf %97, %100 : vector<16x128xf32>
    %102 = math.erf %101 : vector<16x128xf32>
    %cst_27 = arith.constant 1.000000e+00 : f32
    %103 = vector.broadcast %cst_27 : f32 to vector<16x128xf32>
    %104 = arith.addf %103, %102 : vector<16x128xf32>
    %105 = arith.mulf %99, %104 : vector<16x128xf32>
    %cst_28 = arith.constant dense<0.000000e+00> : vector<16x32xf32>
    %106 = tpu.matmul %105, %3, %cst_28 {dimension_numbers = #tpu.dot_dimension_numbers<[1], [0], [0], [1], [0, 0, 1, 1], [], []>} : vector<16x128xf32>, vector<128x32xf32>, vector<16x32xf32> -> vector<16x32xf32>
    %107 = vector.broadcast %13 : vector<1x32xf32> to vector<16x32xf32>
    %108 = arith.addf %106, %107 : vector<16x32xf32>
    %109 = arith.addf %94, %108 : vector<16x32xf32>
    %cst_29 = arith.constant dense<0.000000e+00> : vector<16xf32>
    %110 = vector.multi_reduction <add>, %109, %cst_29 [1] : vector<16x32xf32> to vector<16xf32>
    %111 = vector.shape_cast %110 : vector<16xf32> to vector<16x1xf32>
    %cst_30 = arith.constant 3.200000e+01 : f32
    %112 = vector.broadcast %cst_30 : f32 to vector<16x1xf32>
    %113 = arith.divf %111, %112 : vector<16x1xf32>
    %114 = vector.broadcast %113 : vector<16x1xf32> to vector<16x32xf32>
    %115 = arith.subf %109, %114 : vector<16x32xf32>
    %116 = arith.mulf %115, %115 : vector<16x32xf32>
    %cst_31 = arith.constant dense<0.000000e+00> : vector<16xf32>
    %117 = vector.multi_reduction <add>, %116, %cst_31 [1] : vector<16x32xf32> to vector<16xf32>
    %118 = vector.shape_cast %117 : vector<16xf32> to vector<16x1xf32>
    %cst_32 = arith.constant 3.200000e+01 : f32
    %119 = vector.broadcast %cst_32 : f32 to vector<16x1xf32>
    %120 = arith.divf %118, %119 : vector<16x1xf32>
    %121 = vector.broadcast %113 : vector<16x1xf32> to vector<16x32xf32>
    %122 = arith.subf %109, %121 : vector<16x32xf32>
    %cst_33 = arith.constant 9.99999974E-6 : f32
    %123 = vector.broadcast %cst_33 : f32 to vector<16x1xf32>
    %124 = arith.addf %120, %123 : vector<16x1xf32>
    %125 = math.rsqrt %124 : vector<16x1xf32>
    %126 = vector.broadcast %125 : vector<16x1xf32> to vector<16x32xf32>
    %127 = arith.mulf %122, %126 : vector<16x32xf32>
    %128 = vector.broadcast %11 : vector<1x32xf32> to vector<16x32xf32>
    %129 = arith.mulf %127, %128 : vector<16x32xf32>
    %130 = vector.broadcast %12 : vector<1x32xf32> to vector<16x32xf32>
    %131 = arith.addf %129, %130 : vector<16x32xf32>
    %132 = vector.shape_cast %131 : vector<16x32xf32> to vector<2x8x32xf32>
    %c0_34 = arith.constant 0 : index
    %c0_35 = arith.constant 0 : index
    %c0_36 = arith.constant 0 : index
    %133 = vector.load %arg3[%c0_34, %c0_35, %c0_36] : memref<2x8x32xf32, #tpu.memory_space<vmem>>, vector<2x8x32xf32>
    tpu.vector_store %arg3[%c0_34, %c0_35, %c0_36], %132 {strides = array<i32>} : memref<2x8x32xf32, #tpu.memory_space<vmem>>, vector<2x8x32xf32>,
    return
  }
  func.func @transform_0(%arg0: i32) -> (i32, i32, i32) {
    %c0_i32 = arith.constant 0 : i32
    %c0_i32_0 = arith.constant 0 : i32
    %c0_i32_1 = arith.constant 0 : i32
    return %arg0, %c0_i32, %c0_i32_0 : i32, i32, i32
  }
  func.func @transform_1(%arg0: i32) -> (i32, i32) {
    %c0_i32 = arith.constant 0 : i32
    %c0_i32_0 = arith.constant 0 : i32
    %c0_i32_1 = arith.constant 0 : i32
    return %c0_i32, %c0_i32_0 : i32, i32
  }
  func.func @transform_2(%arg0: i32) -> (i32, i32, i32) {
    %c0_i32 = arith.constant 0 : i32
    %c0_i32_0 = arith.constant 0 : i32
    %c0_i32_1 = arith.constant 0 : i32
    return %arg0, %c0_i32, %c0_i32_0 : i32, i32, i32
  }
}

</mosaic_0001>

<llo_original>
// kernel: tpu_custom_call.1
$region0: #{tpu_custom_call.1}
  #allocation0 [shape = 'u32[]', space=smem, size = 0x4, offset = 0x4, fixed_abs, tag = 'smem constant byte address 0x4 - core index']
  #allocation1 [shape = 'u32[144,128]{1,0:T(1,128)}', space=vmem, size = 0x12000, scoped, tag = 'internal scratch']
  %s0 = inlined_call_operand.hbm [shape: f32[2,8,32], index: 0, kind: input, shape index: {}]
  %s1 = inlined_call_operand.hbm [shape: f32[360,128], index: 1, kind: input, shape index: {}]
  %s2 = inlined_call_operand.hbm [shape: f32[2,8,32], index: 2, kind: output, shape index: {}]
  %s3 = sld [smem:[#allocation0]]
  $region26: #{tpu_custom_call.1} parent=0
    _
  %s5 = ssub.s32 1, %s3
  %s6 = scalar_select 0, %s5, %s3
  $region1: #{tpu_custom_call.1} parent=0
    #allocation2 [shape = 'u8[8192]{0}', space=vmem, size = 0x2000, scoped, tag = 'input window, operand 0, single buffered']
    #allocation3 [shape = 's32[1]{0}', space=sflag, size = 0x4, scoped, tag = 'scoped memory for tpu_custom_call.1']
    #allocation4 [shape = 's32[1]{0}', space=sflag, size = 0x4, scoped, tag = 'scoped memory for tpu_custom_call.1']
    #allocation5 [shape = 'u8[184320]{0}', space=vmem, size = 0x2d000, scoped, tag = 'input window, operand 1, single buffered']
    #allocation6 [shape = 's32[1]{0}', space=sflag, size = 0x4, scoped, tag = 'scoped memory for tpu_custom_call.1']
    #allocation7 [shape = 'u8[8192]{0}', space=vmem, size = 0x2000, scoped, tag = 'output window, operand 0, single buffered']
    %7 = vsyncpa [#allocation3], 0
    %8 = vsyncpa [#allocation6], 0
    %9 = vsyncpa [#allocation4], 0
    // Predicated region
    $region2: #{tpu_custom_call.1} parent=1 // pred_check
      _
    $region3: #{tpu_custom_call.1} parent=1 // pred_check_branch
      %11 = sbr.rel (0) target = $region5
    $region4: #{tpu_custom_call.1} parent=1 // pred_region
      %s13 = ssub.s32 256, 256
      %14 = vsyncadd [#allocation3], %s13
      %s15 = sshll.u32 [#allocation2], 4
      %s16 = int_to_ptr.vmem [resolvable:$true] %s15
      %21 = dma.hbm_to_vmem [thread:$0]  %s0, 256, %s16, [#allocation3], 128, 128, 8
    $region5: #{tpu_custom_call.1} parent=1 // pred_fallthru
      _
    // Predicated region
    $region6: #{tpu_custom_call.1} parent=1 // pred_check
      _
    $region7: #{tpu_custom_call.1} parent=1 // pred_check_branch
      %23 = sbr.rel (0) target = $region9
    $region8: #{tpu_custom_call.1} parent=1 // pred_region
      %s25 = ssub.s32 5760, 5760
      %26 = vsyncadd [#allocation6], %s25
      %s27 = sshll.u32 [#allocation5], 4
      %s28 = int_to_ptr.vmem [resolvable:$true] %s27
      %33 = dma.hbm_to_vmem [thread:$0]  %s1, 5760, %s28, [#allocation6], 128, 128, 8
    $region9: #{tpu_custom_call.1} parent=1 // pred_fallthru
      _
    // Predicated region
    $region10: #{tpu_custom_call.1} parent=1 // pred_check
      _
    $region11: #{tpu_custom_call.1} parent=1 // pred_check_branch
      %35 = sbr.rel (0) target = $region13
    $region12: #{tpu_custom_call.1} parent=1 // pred_region
      %36 = dma.done [#allocation3], 256
    $region13: #{tpu_custom_call.1} parent=1 // pred_fallthru
      _
    // Predicated region
    $region14: #{tpu_custom_call.1} parent=1 // pred_check
      _
    $region15: #{tpu_custom_call.1} parent=1 // pred_check_branch
      %38 = sbr.rel (0) target = $region17
    $region16: #{tpu_custom_call.1} parent=1 // pred_region
      %39 = dma.done [#allocation6], 5760
    $region17: #{tpu_custom_call.1} parent=1 // pred_fallthru
      _
    %v40 = vld [vmem:[#allocation5] sm:$0xff]
    %v41 = vld [vmem:[#allocation5 + $0x8] sm:$0xff]
    %v42 = vld [vmem:[#allocation5 + $0x10] sm:$0xff]
    %v43 = vld [vmem:[#allocation5 + $0x18] sm:$0xff]
    %v44 = vld [vmem:[#allocation5 + $0x20] sm:$0xff]
    %v45 = vld [vmem:[#allocation5 + $0x28] sm:$0xff]
    %v46 = vld [vmem:[#allocation5 + $0x30] sm:$0xff]
    %v47 = vld [vmem:[#allocation5 + $0x38] sm:$0xff]
    %v48 = vld [vmem:[#allocation5 + $0x40] sm:$0xff]
    %v49 = vld [vmem:[#allocation5 + $0x48] sm:$0xff]
    %v50 = vld [vmem:[#allocation5 + $0x50] sm:$0xff]
    %v51 = vld [vmem:[#allocation5 + $0x58] sm:$0xff]
    %v52 = vld [vmem:[#allocation5 + $0x60] sm:$0xff]
    %v53 = vld [vmem:[#allocation5 + $0x68] sm:$0xff]
    %v54 = vld [vmem:[#allocation5 + $0x70] sm:$0xff]
    %v55 = vld [vmem:[#allocation5 + $0x78] sm:$0xff]
    %v56 = vld [vmem:[#allocation5 + $0x80] sm:$0xff]
    %v57 = vld [vmem:[#allocation5 + $0x88] sm:$0xff]
    %v58 = vld [vmem:[#allocation5 + $0x90] sm:$0xff]
    %v59 = vld [vmem:[#allocation5 + $0x98] sm:$0xff]
    %v60 = vld [vmem:[#allocation5 + $0xa0] sm:$0xff]
    %v61 = vld [vmem:[#allocation5 + $0xa8] sm:$0xff]
    %v62 = vld [vmem:[#allocation5 + $0xb0] sm:$0xff]
    %v63 = vld [vmem:[#allocation5 + $0xb8] sm:$0xff]
    %v64 = vld [vmem:[#allocation5 + $0xc0] sm:$0xff]
    %v65 = vld [vmem:[#allocation5 + $0xc8] sm:$0xff]
    %v66 = vld [vmem:[#allocation5 + $0xd0] sm:$0xff]
    %v67 = vld [vmem:[#allocation5 + $0xd8] sm:$0xff]
    %v68 = vld [vmem:[#allocation5 + $0xe0] sm:$0xff]
    %v69 = vld [vmem:[#allocation5 + $0xe8] sm:$0xff]
    %v70 = vld [vmem:[#allocation5 + $0xf0] sm:$0xff]
    %v71 = vld [vmem:[#allocation5 + $0xf8] sm:$0xff]
    %v72 = vld [vmem:[#allocation5 + $0x100] sm:$0xff]
    %v73 = vld [vmem:[#allocation5 + $0x108] sm:$0xff]
    %v74 = vld [vmem:[#allocation5 + $0x110] sm:$0xff]
    %v75 = vld [vmem:[#allocation5 + $0x118] sm:$0xff]
    %v76 = vld [vmem:[#allocation5 + $0x120] sm:$0xff]
    %v77 = vld [vmem:[#allocation5 + $0x128] sm:$0xff]
    %v78 = vld [vmem:[#allocation5 + $0x130] sm:$0xff]
    %v79 = vld [vmem:[#allocation5 + $0x138] sm:$0xff]
    %v80 = vld [vmem:[#allocation5 + $0x140] sm:$0xff]
    %v81 = vld [vmem:[#allocation5 + $0x148] sm:$0xff]
    %v82 = vld [vmem:[#allocation5 + $0x150] sm:$0xff]
    %v83 = vld [vmem:[#allocation5 + $0x158] sm:$0xff]
    %v84 = vld [vmem:[#allocation5 + $0x160] sm:$0xff]
    %v85 = vld [vmem:[#allocation2] sm:$0xff]
    %v86 = vld [vmem:[#allocation2 + $0x8] sm:$0xff]
    %v87 = vlaneseq
    %v88 = vshrl.u32 %v87, 7
    %v89 = vsub.s32 0, %v88
    %v90 = vrot.slane %v68, %v89
    %vm91 = vcmask 261120
    %v93 = vsel %vm91, %v85, 0
    %v96 = vsel %vm91, %v86, 0
    %98 = vmatprep.subr.mxu0 0.0
    %99 = vmatpush1.msra.mxu0 %v40
    %100 = vmatprep.subr.mxu0 0.0
    %101 = vmatpush1.msra.mxu0 %v41
    %102 = vmatprep.subr.mxu0 0.0
    %103 = vmatpush1.msra.mxu0 %v42
    %104 = vmatprep.subr.mxu0 0.0
    %105 = vmatpush1.msra.mxu0 %v43
    %106 = vmatprep.subr.mxu0 0.0
    %107 = vmatpush1.msra.mxu0 0.0
    %108 = vmatprep.subr.mxu0 0.0
    %109 = vmatpush1.msra.mxu0 0.0
    %110 = vmatprep.subr.mxu0 0.0
    %111 = vmatpush1.msra.mxu0 0.0
    %112 = vmatprep.subr.mxu0 0.0
    %113 = vmatpush1.msra.mxu0 0.0
    %114 = vmatprep.subr.mxu0 0.0
    %115 = vmatpush1.msra.mxu0 0.0
    %116 = vmatprep.subr.mxu0 0.0
    %117 = vmatpush1.msra.mxu0 0.0
    %118 = vmatprep.subr.mxu0 0.0
    %119 = vmatpush1.msra.mxu0 0.0
    %120 = vmatprep.subr.mxu0 0.0
    %121 = vmatpush1.msra.mxu0 0.0
    %122 = vmatprep.subr.mxu0 0.0
    %123 = vmatpush1.msra.mxu0 0.0
    %124 = vmatprep.subr.mxu0 0.0
    %125 = vmatpush1.msra.mxu0 0.0
    %126 = vmatprep.subr.mxu0 0.0
    %127 = vmatpush1.msra.mxu0 0.0
    %128 = vmatprep.subr.mxu0 0.0
    %129 = vmatpush1.msra.mxu0 0.0
    %130 = vmatprep.subr.mxu0 0.0
    %131 = vmatpush1.msra.mxu0 0.0
    %132 = vmatprep.subr.mxu0 0.0
    %133 = vmatpush1.msra.mxu0 0.0
    %134 = vmatprep.subr.mxu0 0.0
    %135 = vmatpush1.msra.mxu0 0.0
    %136 = vmatprep.subr.mxu0 0.0
    %137 = vmatpush1.msra.mxu0 0.0
    %138 = vmatprep.subr.mxu0 0.0
    %139 = vmatpush1.msra.mxu0 0.0
    %140 = vmatprep.subr.mxu0 0.0
    %141 = vmatpush1.msra.mxu0 0.0
    %142 = vmatprep.subr.mxu0 0.0
    %143 = vmatpush1.msra.mxu0 0.0
    %144 = vmatprep.subr.mxu0 0.0
    %145 = vmatpush1.msra.mxu0 0.0
    %146 = vmatprep.subr.mxu0 0.0
    %147 = vmatpush1.msra.mxu0 0.0
    %148 = vmatprep.subr.mxu0 0.0
    %149 = vmatpush1.msra.mxu0 0.0
    %150 = vmatprep.subr.mxu0 0.0
    %151 = vmatpush1.msra.mxu0 0.0
    %152 = vmatprep.subr.mxu0 0.0
    %153 = vmatpush1.msra.mxu0 0.0
    %154 = vmatprep.subr.mxu0 0.0
    %155 = vmatpush1.msra.mxu0 0.0
    %156 = vmatprep.subr.mxu0 0.0
    %157 = vmatpush1.msra.mxu0 0.0
    %158 = vmatprep.subr.mxu0 0.0
    %159 = vmatpush1.msra.mxu0 0.0
    %160 = vmatprep.subr.mxu0 0.0
    %161 = vmatpush1.msra.mxu0 0.0
    %162 = vmatprep.mubr.f32.mxu0 0.0
    %163 = vmatmul.mubr.f32.gmra.mrb[0].mxu0 %v93
    %v164 = vpop.f32.mrb[0].mxu0
    %v165 = vadd.f32 %v90, %v164
    %v166 = vpop.f32.mrb[0].mxu0
    %167 = vmatprep.mubr.f32.mxu0 0.0
    %168 = vmatmul.mubr.f32.gmra.mrb[0].mxu0 %v96
    %v169 = vpop.f32.mrb[0].mxu0
    %v170 = vadd.f32 %v90, %v169
    %v171 = vpop.f32.mrb[0].mxu0
    %172 = vdwg.mxu0
    %v173 = vmul.f32 %v165, 0.70710677
    %v174 = vmul.f32 %v170, 0.70710677
    %191 = vrot.lane.b32.xlu0 %v69, 32
    %v192 = vpop.permute.xlu0 %191
    %193 = vrot.lane.b32.xlu0 %v70, 32
    %v194 = vpop.permute.xlu0 %193
    %195 = vrot.lane.b32.xlu0 %v71, 32
    %v196 = vpop.permute.xlu0 %195
    %197 = vrot.lane.b32.xlu0 %v72, 32
    %v198 = vpop.permute.xlu0 %197
    %199 = vrot.lane.b32.xlu0 %v73, 32
    %v200 = vpop.permute.xlu0 %199
    %201 = vrot.lane.b32.xlu0 %v74, 32
    %v202 = vpop.permute.xlu0 %201
    %203 = vrot.lane.b32.xlu0 %v75, 32
    %v204 = vpop.permute.xlu0 %203
    %205 = vrot.lane.b32.xlu0 %v76, 32
    %v206 = vpop.permute.xlu0 %205
    %207 = vrot.lane.b32.xlu0 %v77, 32
    %v208 = vpop.permute.xlu0 %207
    %209 = vrot.lane.b32.xlu0 %v78, 32
    %v210 = vpop.permute.xlu0 %209
    %211 = vrot.lane.b32.xlu0 %v79, 32
    %v212 = vpop.permute.xlu0 %211
    %213 = vrot.lane.b32.xlu0 %v80, 32
    %v214 = vpop.permute.xlu0 %213
    %215 = vrot.lane.b32.xlu0 %v81, 32
    %v216 = vpop.permute.xlu0 %215
    %217 = vrot.lane.b32.xlu0 %v82, 32
    %v218 = vpop.permute.xlu0 %217
    %219 = vrot.lane.b32.xlu0 %v83, 32
    %v220 = vpop.permute.xlu0 %219
    %221 = vrot.lane.b32.xlu0 %v84, 32
    %v222 = vpop.permute.xlu0 %221
    %v239 = vmul.f32 %v165, %v192
    %v240 = vmul.f32 %v165, %v194
    %v241 = vmul.f32 %v165, %v196
    %v242 = vmul.f32 %v165, %v198
    %v243 = vmul.f32 %v165, %v200
    %v244 = vmul.f32 %v165, %v202
    %v245 = vmul.f32 %v165, %v204
    %v246 = vmul.f32 %v165, %v206
    %v247 = vmul.f32 %v165, %v208
    %v248 = vmul.f32 %v165, %v210
    %v249 = vmul.f32 %v165, %v212
    %v250 = vmul.f32 %v165, %v214
    %v251 = vmul.f32 %v165, %v216
    %v252 = vmul.f32 %v165, %v218
    %v253 = vmul.f32 %v165, %v220
    %v254 = vmul.f32 %v165, %v222
    %255 = vrot.lane.b32.xlu0 %v69, 64
    %v256 = vpop.permute.xlu0 %255
    %257 = vrot.lane.b32.xlu0 %v70, 64
    %v258 = vpop.permute.xlu0 %257
    %259 = vrot.lane.b32.xlu0 %v71, 64
    %v260 = vpop.permute.xlu0 %259
    %261 = vrot.lane.b32.xlu0 %v72, 64
    %v262 = vpop.permute.xlu0 %261
    %263 = vrot.lane.b32.xlu0 %v73, 64
    %v264 = vpop.permute.xlu0 %263
    %265 = vrot.lane.b32.xlu0 %v74, 64
    %v266 = vpop.permute.xlu0 %265
    %267 = vrot.lane.b32.xlu0 %v75, 64
    %v268 = vpop.permute.xlu0 %267
    %269 = vrot.lane.b32.xlu0 %v76, 64
    %v270 = vpop.permute.xlu0 %269
    %271 = vrot.lane.b32.xlu0 %v77, 64
    %v272 = vpop.permute.xlu0 %271
    %273 = vrot.lane.b32.xlu0 %v78, 64
    %v274 = vpop.permute.xlu0 %273
    %275 = vrot.lane.b32.xlu0 %v79, 64
    %v276 = vpop.permute.xlu0 %275
    %277 = vrot.lane.b32.xlu0 %v80, 64
    %v278 = vpop.permute.xlu0 %277
    %279 = vrot.lane.b32.xlu0 %v81, 64
    %v280 = vpop.permute.xlu0 %279
    %281 = vrot.lane.b32.xlu0 %v82, 64
    %v282 = vpop.permute.xlu0 %281
    %283 = vrot.lane.b32.xlu0 %v83, 64
    %v284 = vpop.permute.xlu0 %283
    %285 = vrot.lane.b32.xlu0 %v84, 64
    %v286 = vpop.permute.xlu0 %285
    %v303 = vmul.f32 %v165, %v256
    %v304 = vmul.f32 %v165, %v258
    %v305 = vmul.f32 %v165, %v260
    %v306 = vmul.f32 %v165, %v262
    %v307 = vmul.f32 %v165, %v264
    %v308 = vmul.f32 %v165, %v266
    %v309 = vmul.f32 %v165, %v268
    %v310 = vmul.f32 %v165, %v270
    %v311 = vmul.f32 %v165, %v272
    %v312 = vmul.f32 %v165, %v274
    %v313 = vmul.f32 %v165, %v276
    %v314 = vmul.f32 %v165, %v278
    %v315 = vmul.f32 %v165, %v280
    %v316 = vmul.f32 %v165, %v282
    %v317 = vmul.f32 %v165, %v284
    %v318 = vmul.f32 %v165, %v286
    %335 = vrot.lane.b32.xlu0 %v239, 96
    %v336 = vpop.permute.xlu0 %335
    %337 = vrot.lane.b32.xlu0 %v240, 96
    %v338 = vpop.permute.xlu0 %337
    %339 = vrot.lane.b32.xlu0 %v241, 96
    %v340 = vpop.permute.xlu0 %339
    %341 = vrot.lane.b32.xlu0 %v242, 96
    %v342 = vpop.permute.xlu0 %341
    %343 = vrot.lane.b32.xlu0 %v243, 96
    %v344 = vpop.permute.xlu0 %343
    %345 = vrot.lane.b32.xlu0 %v244, 96
    %v346 = vpop.permute.xlu0 %345
    %347 = vrot.lane.b32.xlu0 %v245, 96
    %v348 = vpop.permute.xlu0 %347
    %349 = vrot.lane.b32.xlu0 %v246, 96
    %v350 = vpop.permute.xlu0 %349
    %351 = vrot.lane.b32.xlu0 %v247, 96
    %v352 = vpop.permute.xlu0 %351
    %353 = vrot.lane.b32.xlu0 %v248, 96
    %v354 = vpop.permute.xlu0 %353
    %355 = vrot.lane.b32.xlu0 %v249, 96
    %v356 = vpop.permute.xlu0 %355
    %357 = vrot.lane.b32.xlu0 %v250, 96
    %v358 = vpop.permute.xlu0 %357
    %359 = vrot.lane.b32.xlu0 %v251, 96
    %v360 = vpop.permute.xlu0 %359
    %361 = vrot.lane.b32.xlu0 %v252, 96
    %v362 = vpop.permute.xlu0 %361
    %363 = vrot.lane.b32.xlu0 %v253, 96
    %v364 = vpop.permute.xlu0 %363
    %365 = vrot.lane.b32.xlu0 %v254, 96
    %v366 = vpop.permute.xlu0 %365
    %v368 = vsel %vm91, %v173, 0
    %v370 = vsel %vm91, %v336, 0
    %v372 = vsel %vm91, %v338, 0
    %v374 = vsel %vm91, %v340, 0
    %v376 = vsel %vm91, %v342, 0
    %v378 = vsel %vm91, %v344, 0
    %v380 = vsel %vm91, %v346, 0
    %v382 = vsel %vm91, %v348, 0
    %v384 = vsel %vm91, %v350, 0
    %v386 = vsel %vm91, %v352, 0
    %v388 = vsel %vm91, %v354, 0
    %v390 = vsel %vm91, %v356, 0
    %v392 = vsel %vm91, %v358, 0
    %v394 = vsel %vm91, %v360, 0
    %v396 = vsel %vm91, %v362, 0
    %v398 = vsel %vm91, %v364, 0
    %v400 = vsel %vm91, %v366, 0
    %402 = vmatprep.subr.mxu0 0.0
    %403 = vmatpush1.xpose.msra.mxu0 %v370
    %404 = vmatprep.subr.mxu0 0.0
    %405 = vmatpush1.xpose.msra.mxu0 %v372
    %406 = vmatprep.subr.mxu0 0.0
    %407 = vmatpush1.xpose.msra.mxu0 %v374
    %408 = vmatprep.subr.mxu0 0.0
    %409 = vmatpush1.xpose.msra.mxu0 %v376
    %410 = vmatprep.subr.mxu0 0.0
    %411 = vmatpush1.xpose.msra.mxu0 %v378
    %412 = vmatprep.subr.mxu0 0.0
    %413 = vmatpush1.xpose.msra.mxu0 %v380
    %414 = vmatprep.subr.mxu0 0.0
    %415 = vmatpush1.xpose.msra.mxu0 %v382
    %416 = vmatprep.subr.mxu0 0.0
    %417 = vmatpush1.xpose.msra.mxu0 %v384
    %418 = vmatprep.subr.mxu0 0.0
    %419 = vmatpush1.xpose.msra.mxu0 %v386
    %420 = vmatprep.subr.mxu0 0.0
    %421 = vmatpush1.xpose.msra.mxu0 %v388
    %422 = vmatprep.subr.mxu0 0.0
    %423 = vmatpush1.xpose.msra.mxu0 %v390
    %424 = vmatprep.subr.mxu0 0.0
    %425 = vmatpush1.xpose.msra.mxu0 %v392
    %426 = vmatprep.subr.mxu0 0.0
    %427 = vmatpush1.xpose.msra.mxu0 %v394
    %428 = vmatprep.subr.mxu0 0.0
    %429 = vmatpush1.xpose.msra.mxu0 %v396
    %430 = vmatprep.subr.mxu0 0.0
    %431 = vmatpush1.xpose.msra.mxu0 %v398
    %432 = vmatprep.subr.mxu0 0.0
    %433 = vmatpush1.xpose.msra.mxu0 %v400
    %434 = vmatprep.subr.mxu0 0.0
    %435 = vmatpush1.xpose.msra.mxu0 0.0
    %436 = vmatprep.subr.mxu0 0.0
    %437 = vmatpush1.xpose.msra.mxu0 0.0
    %438 = vmatprep.subr.mxu0 0.0
    %439 = vmatpush1.xpose.msra.mxu0 0.0
    %440 = vmatprep.subr.mxu0 0.0
    %441 = vmatpush1.xpose.msra.mxu0 0.0
    %442 = vmatprep.subr.mxu0 0.0
    %443 = vmatpush1.xpose.msra.mxu0 0.0
    %444 = vmatprep.subr.mxu0 0.0
    %445 = vmatpush1.xpose.msra.mxu0 0.0
    %446 = vmatprep.subr.mxu0 0.0
    %447 = vmatpush1.xpose.msra.mxu0 0.0
    %448 = vmatprep.subr.mxu0 0.0
    %449 = vmatpush1.xpose.msra.mxu0 0.0
    %450 = vmatprep.subr.mxu0 0.0
    %451 = vmatpush1.xpose.msra.mxu0 0.0
    %452 = vmatprep.subr.mxu0 0.0
    %453 = vmatpush1.xpose.msra.mxu0 0.0
    %454 = vmatprep.subr.mxu0 0.0
    %455 = vmatpush1.xpose.msra.mxu0 0.0
    %456 = vmatprep.subr.mxu0 0.0
    %457 = vmatpush1.xpose.msra.mxu0 0.0
    %458 = vmatprep.subr.mxu0 0.0
    %459 = vmatpush1.xpose.msra.mxu0 0.0
    %460 = vmatprep.subr.mxu0 0.0
    %461 = vmatpush1.xpose.msra.mxu0 0.0
    %462 = vmatprep.subr.mxu0 0.0
    %463 = vmatpush1.xpose.msra.mxu0 0.0
    %464 = vmatprep.subr.mxu0 0.0
    %465 = vmatpush1.xpose.msra.mxu0 0.0
    %466 = vmatprep.mubr.f32.mxu0 0.0
    %467 = vmatmul.mubr.f32.gmra.mrb[0].mxu0 %v368
    %v468 = vpop.f32.mrb[0].mxu0
    %v469 = vadd.f32 0.0, %v468
    %v470 = vpop.f32.mrb[0].mxu0
    %471 = vdwg.mxu0
    %472 = vmax.xlane.f32.xlu0 %v469
    %v473 = vpop.xlane.xlu0 %472
    %v474 = vsub.f32 %v469, %v473
    %v475 = vmul.f32 %v474, 1.442695
    %v476 = vpow.pop %v475
    %477 = vmatprep.subr.mxu0 0.0
    %478 = vmatpush1.msra.mxu0 %v69
    %479 = vmatprep.subr.mxu0 0.0
    %480 = vmatpush1.msra.mxu0 %v70
    %481 = vmatprep.subr.mxu0 0.0
    %482 = vmatpush1.msra.mxu0 %v71
    %483 = vmatprep.subr.mxu0 0.0
    %484 = vmatpush1.msra.mxu0 %v72
    %485 = vmatprep.subr.mxu0 0.0
    %486 = vmatpush1.msra.mxu0 %v73
    %487 = vmatprep.subr.mxu0 0.0
    %488 = vmatpush1.msra.mxu0 %v74
    %489 = vmatprep.subr.mxu0 0.0
    %490 = vmatpush1.msra.mxu0 %v75
    %491 = vmatprep.subr.mxu0 0.0
    %492 = vmatpush1.msra.mxu0 %v76
    %493 = vmatprep.subr.mxu0 0.0
    %494 = vmatpush1.msra.mxu0 %v77
    %495 = vmatprep.subr.mxu0 0.0
    %496 = vmatpush1.msra.mxu0 %v78
    %497 = vmatprep.subr.mxu0 0.0
    %498 = vmatpush1.msra.mxu0 %v79
    %499 = vmatprep.subr.mxu0 0.0
    %500 = vmatpush1.msra.mxu0 %v80
    %501 = vmatprep.subr.mxu0 0.0
    %502 = vmatpush1.msra.mxu0 %v81
    %503 = vmatprep.subr.mxu0 0.0
    %504 = vmatpush1.msra.mxu0 %v82
    %505 = vmatprep.subr.mxu0 0.0
    %506 = vmatpush1.msra.mxu0 %v83
    %507 = vmatprep.subr.mxu0 0.0
    %508 = vmatpush1.msra.mxu0 %v84
    %509 = vmatprep.subr.mxu0 0.0
    %510 = vmatpush1.msra.mxu0 0.0
    %511 = vmatprep.subr.mxu0 0.0
    %512 = vmatpush1.msra.mxu0 0.0
    %513 = vmatprep.subr.mxu0 0.0
    %514 = vmatpush1.msra.mxu0 0.0
    %515 = vmatprep.subr.mxu0 0.0
    %516 = vmatpush1.msra.mxu0 0.0
    %517 = vmatprep.subr.mxu0 0.0
    %518 = vmatpush1.msra.mxu0 0.0
    %519 = vmatprep.subr.mxu0 0.0
    %520 = vmatpush1.msra.mxu0 0.0
    %521 = vmatprep.subr.mxu0 0.0
    %522 = vmatpush1.msra.mxu0 0.0
    %523 = vmatprep.subr.mxu0 0.0
    %524 = vmatpush1.msra.mxu0 0.0
    %525 = vmatprep.subr.mxu0 0.0
    %526 = vmatpush1.msra.mxu0 0.0
    %527 = vmatprep.subr.mxu0 0.0
    %528 = vmatpush1.msra.mxu0 0.0
    %529 = vmatprep.subr.mxu0 0.0
    %530 = vmatpush1.msra.mxu0 0.0
    %531 = vmatprep.subr.mxu0 0.0
    %532 = vmatpush1.msra.mxu0 0.0
    %533 = vmatprep.subr.mxu0 0.0
    %534 = vmatpush1.msra.mxu0 0.0
    %535 = vmatprep.subr.mxu0 0.0
    %536 = vmatpush1.msra.mxu0 0.0
    %537 = vmatprep.subr.mxu0 0.0
    %538 = vmatpush1.msra.mxu0 0.0
    %539 = vmatprep.subr.mxu0 0.0
    %540 = vmatpush1.msra.mxu0 0.0
    %541 = vmatprep.mubr.f32.mxu0 0.0
    %542 = vmatmul.mubr.f32.gmra.mrb[0].mxu0 %v476
    %v543 = vpop.f32.mrb[0].mxu0
    %v544 = vadd.f32 0.0, %v543
    %v545 = vpop.f32.mrb[0].mxu0
    %546 = vdwg.mxu0
    %563 = vrot.lane.b32.xlu0 %v303, 64
    %v564 = vpop.permute.xlu0 %563
    %565 = vrot.lane.b32.xlu0 %v304, 64
    %v566 = vpop.permute.xlu0 %565
    %567 = vrot.lane.b32.xlu0 %v305, 64
    %v568 = vpop.permute.xlu0 %567
    %569 = vrot.lane.b32.xlu0 %v306, 64
    %v570 = vpop.permute.xlu0 %569
    %571 = vrot.lane.b32.xlu0 %v307, 64
    %v572 = vpop.permute.xlu0 %571
    %573 = vrot.lane.b32.xlu0 %v308, 64
    %v574 = vpop.permute.xlu0 %573
    %575 = vrot.lane.b32.xlu0 %v309, 64
    %v576 = vpop.permute.xlu0 %575
    %577 = vrot.lane.b32.xlu0 %v310, 64
    %v578 = vpop.permute.xlu0 %577
    %579 = vrot.lane.b32.xlu0 %v311, 64
    %v580 = vpop.permute.xlu0 %579
    %581 = vrot.lane.b32.xlu0 %v312, 64
    %v582 = vpop.permute.xlu0 %581
    %583 = vrot.lane.b32.xlu0 %v313, 64
    %v584 = vpop.permute.xlu0 %583
    %585 = vrot.lane.b32.xlu0 %v314, 64
    %v586 = vpop.permute.xlu0 %585
    %587 = vrot.lane.b32.xlu0 %v315, 64
    %v588 = vpop.permute.xlu0 %587
    %589 = vrot.lane.b32.xlu0 %v316, 64
    %v590 = vpop.permute.xlu0 %589
    %591 = vrot.lane.b32.xlu0 %v317, 64
    %v592 = vpop.permute.xlu0 %591
    %593 = vrot.lane.b32.xlu0 %v318, 64
    %v594 = vpop.permute.xlu0 %593
    %611 = vmatprep.subr.mxu0 0.0
    %612 = vmatpush1.msra.mxu0 %v564
    %613 = vmatprep.subr.mxu0 0.0
    %614 = vmatpush1.msra.mxu0 %v566
    %615 = vmatprep.subr.mxu0 0.0
    %616 = vmatpush1.msra.mxu0 %v568
    %617 = vmatprep.subr.mxu0 0.0
    %618 = vmatpush1.msra.mxu0 %v570
    %619 = vmatprep.subr.mxu0 0.0
    %620 = vmatpush1.msra.mxu0 %v572
    %621 = vmatprep.subr.mxu0 0.0
    %622 = vmatpush1.msra.mxu0 %v574
    %623 = vmatprep.subr.mxu0 0.0
    %624 = vmatpush1.msra.mxu0 %v576
    %625 = vmatprep.subr.mxu0 0.0
    %626 = vmatpush1.msra.mxu0 %v578
    %627 = vmatprep.subr.mxu0 0.0
    %628 = vmatpush1.msra.mxu0 %v580
    %629 = vmatprep.subr.mxu0 0.0
    %630 = vmatpush1.msra.mxu0 %v582
    %631 = vmatprep.subr.mxu0 0.0
    %632 = vmatpush1.msra.mxu0 %v584
    %633 = vmatprep.subr.mxu0 0.0
    %634 = vmatpush1.msra.mxu0 %v586
    %635 = vmatprep.subr.mxu0 0.0
    %636 = vmatpush1.msra.mxu0 %v588
    %637 = vmatprep.subr.mxu0 0.0
    %638 = vmatpush1.msra.mxu0 %v590
    %639 = vmatprep.subr.mxu0 0.0
    %640 = vmatpush1.msra.mxu0 %v592
    %641 = vmatprep.subr.mxu0 0.0
    %642 = vmatpush1.msra.mxu0 %v594
    %643 = vmatprep.subr.mxu0 0.0
    %644 = vmatpush1.msra.mxu0 0.0
    %645 = vmatprep.subr.mxu0 0.0
    %646 = vmatpush1.msra.mxu0 0.0
    %647 = vmatprep.subr.mxu0 0.0
    %648 = vmatpush1.msra.mxu0 0.0
    %649 = vmatprep.subr.mxu0 0.0
    %650 = vmatpush1.msra.mxu0 0.0
    %651 = vmatprep.subr.mxu0 0.0
    %652 = vmatpush1.msra.mxu0 0.0
    %653 = vmatprep.subr.mxu0 0.0
    %654 = vmatpush1.msra.mxu0 0.0
    %655 = vmatprep.subr.mxu0 0.0
    %656 = vmatpush1.msra.mxu0 0.0
    %657 = vmatprep.subr.mxu0 0.0
    %658 = vmatpush1.msra.mxu0 0.0
    %659 = vmatprep.subr.mxu0 0.0
    %660 = vmatpush1.msra.mxu0 0.0
    %661 = vmatprep.subr.mxu0 0.0
    %662 = vmatpush1.msra.mxu0 0.0
    %663 = vmatprep.subr.mxu0 0.0
    %664 = vmatpush1.msra.mxu0 0.0
    %665 = vmatprep.subr.mxu0 0.0
    %666 = vmatpush1.msra.mxu0 0.0
    %667 = vmatprep.subr.mxu0 0.0
    %668 = vmatpush1.msra.mxu0 0.0
    %669 = vmatprep.subr.mxu0 0.0
    %670 = vmatpush1.msra.mxu0 0.0
    %671 = vmatprep.subr.mxu0 0.0
    %672 = vmatpush1.msra.mxu0 0.0
    %673 = vmatprep.subr.mxu0 0.0
    %674 = vmatpush1.msra.mxu0 0.0
    %675 = vmatprep.mubr.f32.mxu0 0.0
    %676 = vmatmul.mubr.f32.gmra.mrb[0].mxu0 %v476
    %v677 = vpop.f32.mrb[0].mxu0
    %v678 = vadd.f32 0.0, %v677
    %v679 = vpop.f32.mrb[0].mxu0
    %680 = vdwg.mxu0
    %v681 = vrcp.pop %v544
    %v682 = vmul.f32 %v678, %v681
    %v683 = vmul.f32 %v170, %v192
    %v684 = vmul.f32 %v170, %v194
    %v685 = vmul.f32 %v170, %v196
    %v686 = vmul.f32 %v170, %v198
    %v687 = vmul.f32 %v170, %v200
    %v688 = vmul.f32 %v170, %v202
    %v689 = vmul.f32 %v170, %v204
    %v690 = vmul.f32 %v170, %v206
    %v691 = vmul.f32 %v170, %v208
    %v692 = vmul.f32 %v170, %v210
    %v693 = vmul.f32 %v170, %v212
    %v694 = vmul.f32 %v170, %v214
    %v695 = vmul.f32 %v170, %v216
    %v696 = vmul.f32 %v170, %v218
    %v697 = vmul.f32 %v170, %v220
    %v698 = vmul.f32 %v170, %v222
    %v699 = vmul.f32 %v170, %v256
    %v700 = vmul.f32 %v170, %v258
    %v701 = vmul.f32 %v170, %v260
    %v702 = vmul.f32 %v170, %v262
    %v703 = vmul.f32 %v170, %v264
    %v704 = vmul.f32 %v170, %v266
    %v705 = vmul.f32 %v170, %v268
    %v706 = vmul.f32 %v170, %v270
    %v707 = vmul.f32 %v170, %v272
    %v708 = vmul.f32 %v170, %v274
    %v709 = vmul.f32 %v170, %v276
    %v710 = vmul.f32 %v170, %v278
    %v711 = vmul.f32 %v170, %v280
    %v712 = vmul.f32 %v170, %v282
    %v713 = vmul.f32 %v170, %v284
    %v714 = vmul.f32 %v170, %v286
    %731 = vrot.lane.b32.xlu0 %v683, 96
    %v732 = vpop.permute.xlu0 %731
    %733 = vrot.lane.b32.xlu0 %v684, 96
    %v734 = vpop.permute.xlu0 %733
    %735 = vrot.lane.b32.xlu0 %v685, 96
    %v736 = vpop.permute.xlu0 %735
    %737 = vrot.lane.b32.xlu0 %v686, 96
    %v738 = vpop.permute.xlu0 %737
    %739 = vrot.lane.b32.xlu0 %v687, 96
    %v740 = vpop.permute.xlu0 %739
    %741 = vrot.lane.b32.xlu0 %v688, 96
    %v742 = vpop.permute.xlu0 %741
    %743 = vrot.lane.b32.xlu0 %v689, 96
    %v744 = vpop.permute.xlu0 %743
    %745 = vrot.lane.b32.xlu0 %v690, 96
    %v746 = vpop.permute.xlu0 %745
    %747 = vrot.lane.b32.xlu0 %v691, 96
    %v748 = vpop.permute.xlu0 %747
    %749 = vrot.lane.b32.xlu0 %v692, 96
    %v750 = vpop.permute.xlu0 %749
    %751 = vrot.lane.b32.xlu0 %v693, 96
    %v752 = vpop.permute.xlu0 %751
    %753 = vrot.lane.b32.xlu0 %v694, 96
    %v754 = vpop.permute.xlu0 %753
    %755 = vrot.lane.b32.xlu0 %v695, 96
    %v756 = vpop.permute.xlu0 %755
    %757 = vrot.lane.b32.xlu0 %v696, 96
    %v758 = vpop.permute.xlu0 %757
    %759 = vrot.lane.b32.xlu0 %v697, 96
    %v760 = vpop.permute.xlu0 %759
    %761 = vrot.lane.b32.xlu0 %v698, 96
    %v762 = vpop.permute.xlu0 %761
    %v764 = vsel %vm91, %v174, 0
    %v766 = vsel %vm91, %v732, 0
    %v768 = vsel %vm91, %v734, 0
    %v770 = vsel %vm91, %v736, 0
    %v772 = vsel %vm91, %v738, 0
    %v774 = vsel %vm91, %v740, 0
    %v776 = vsel %vm91, %v742, 0
    %v778 = vsel %vm91, %v744, 0
    %v780 = vsel %vm91, %v746, 0
    %v782 = vsel %vm91, %v748, 0
    %v784 = vsel %vm91, %v750, 0
    %v786 = vsel %vm91, %v752, 0
    %v788 = vsel %vm91, %v754, 0
    %v790 = vsel %vm91, %v756, 0
    %v792 = vsel %vm91, %v758, 0
    %v794 = vsel %vm91, %v760, 0
    %v796 = vsel %vm91, %v762, 0
    %798 = vmatprep.subr.mxu0 0.0
    %799 = vmatpush1.xpose.msra.mxu0 %v766
    %800 = vmatprep.subr.mxu0 0.0
    %801 = vmatpush1.xpose.msra.mxu0 %v768
    %802 = vmatprep.subr.mxu0 0.0
    %803 = vmatpush1.xpose.msra.mxu0 %v770
    %804 = vmatprep.subr.mxu0 0.0
    %805 = vmatpush1.xpose.msra.mxu0 %v772
    %806 = vmatprep.subr.mxu0 0.0
    %807 = vmatpush1.xpose.msra.mxu0 %v774
    %808 = vmatprep.subr.mxu0 0.0
    %809 = vmatpush1.xpose.msra.mxu0 %v776
    %810 = vmatprep.subr.mxu0 0.0
    %811 = vmatpush1.xpose.msra.mxu0 %v778
    %812 = vmatprep.subr.mxu0 0.0
    %813 = vmatpush1.xpose.msra.mxu0 %v780
    %814 = vmatprep.subr.mxu0 0.0
    %815 = vmatpush1.xpose.msra.mxu0 %v782
    %816 = vmatprep.subr.mxu0 0.0
    %817 = vmatpush1.xpose.msra.mxu0 %v784
    %818 = vmatprep.subr.mxu0 0.0
    %819 = vmatpush1.xpose.msra.mxu0 %v786
    %820 = vmatprep.subr.mxu0 0.0
    %821 = vmatpush1.xpose.msra.mxu0 %v788
    %822 = vmatprep.subr.mxu0 0.0
    %823 = vmatpush1.xpose.msra.mxu0 %v790
    %824 = vmatprep.subr.mxu0 0.0
    %825 = vmatpush1.xpose.msra.mxu0 %v792
    %826 = vmatprep.subr.mxu0 0.0
    %827 = vmatpush1.xpose.msra.mxu0 %v794
    %828 = vmatprep.subr.mxu0 0.0
    %829 = vmatpush1.xpose.msra.mxu0 %v796
    %830 = vmatprep.subr.mxu0 0.0
    %831 = vmatpush1.xpose.msra.mxu0 0.0
    %832 = vmatprep.subr.mxu0 0.0
    %833 = vmatpush1.xpose.msra.mxu0 0.0
    %834 = vmatprep.subr.mxu0 0.0
    %835 = vmatpush1.xpose.msra.mxu0 0.0
    %836 = vmatprep.subr.mxu0 0.0
    %837 = vmatpush1.xpose.msra.mxu0 0.0
    %838 = vmatprep.subr.mxu0 0.0
    %839 = vmatpush1.xpose.msra.mxu0 0.0
    %840 = vmatprep.subr.mxu0 0.0
    %841 = vmatpush1.xpose.msra.mxu0 0.0
    %842 = vmatprep.subr.mxu0 0.0
    %843 = vmatpush1.xpose.msra.mxu0 0.0
    %844 = vmatprep.subr.mxu0 0.0
    %845 = vmatpush1.xpose.msra.mxu0 0.0
    %846 = vmatprep.subr.mxu0 0.0
    %847 = vmatpush1.xpose.msra.mxu0 0.0
    %848 = vmatprep.subr.mxu0 0.0
    %849 = vmatpush1.xpose.msra.mxu0 0.0
    %850 = vmatprep.subr.mxu0 0.0
    %851 = vmatpush1.xpose.msra.mxu0 0.0
    %852 = vmatprep.subr.mxu0 0.0
    %853 = vmatpush1.xpose.msra.mxu0 0.0
    %854 = vmatprep.subr.mxu0 0.0
    %855 = vmatpush1.xpose.msra.mxu0 0.0
    %856 = vmatprep.subr.mxu0 0.0
    %857 = vmatpush1.xpose.msra.mxu0 0.0
    %858 = vmatprep.subr.mxu0 0.0
    %859 = vmatpush1.xpose.msra.mxu0 0.0
    %860 = vmatprep.subr.mxu0 0.0
    %861 = vmatpush1.xpose.msra.mxu0 0.0
    %862 = vmatprep.mubr.f32.mxu0 0.0
    %863 = vmatmul.mubr.f32.gmra.mrb[0].mxu0 %v764
    %v864 = vpop.f32.mrb[0].mxu0
    %v865 = vadd.f32 0.0, %v864
    %v866 = vpop.f32.mrb[0].mxu0
    %867 = vdwg.mxu0
    %868 = vmax.xlane.f32.xlu0 %v865
    %v869 = vpop.xlane.xlu0 %868
    %v870 = vsub.f32 %v865, %v869
    %v871 = vmul.f32 %v870, 1.442695
    %v872 = vpow.pop %v871
    %873 = vmatprep.subr.mxu0 0.0
    %874 = vmatpush1.msra.mxu0 %v69
    %875 = vmatprep.subr.mxu0 0.0
    %876 = vmatpush1.msra.mxu0 %v70
    %877 = vmatprep.subr.mxu0 0.0
    %878 = vmatpush1.msra.mxu0 %v71
    %879 = vmatprep.subr.mxu0 0.0
    %880 = vmatpush1.msra.mxu0 %v72
    %881 = vmatprep.subr.mxu0 0.0
    %882 = vmatpush1.msra.mxu0 %v73
    %883 = vmatprep.subr.mxu0 0.0
    %884 = vmatpush1.msra.mxu0 %v74
    %885 = vmatprep.subr.mxu0 0.0
    %886 = vmatpush1.msra.mxu0 %v75
    %887 = vmatprep.subr.mxu0 0.0
    %888 = vmatpush1.msra.mxu0 %v76
    %889 = vmatprep.subr.mxu0 0.0
    %890 = vmatpush1.msra.mxu0 %v77
    %891 = vmatprep.subr.mxu0 0.0
    %892 = vmatpush1.msra.mxu0 %v78
    %893 = vmatprep.subr.mxu0 0.0
    %894 = vmatpush1.msra.mxu0 %v79
    %895 = vmatprep.subr.mxu0 0.0
    %896 = vmatpush1.msra.mxu0 %v80
    %897 = vmatprep.subr.mxu0 0.0
    %898 = vmatpush1.msra.mxu0 %v81
    %899 = vmatprep.subr.mxu0 0.0
    %900 = vmatpush1.msra.mxu0 %v82
    %901 = vmatprep.subr.mxu0 0.0
    %902 = vmatpush1.msra.mxu0 %v83
    %903 = vmatprep.subr.mxu0 0.0
    %904 = vmatpush1.msra.mxu0 %v84
    %905 = vmatprep.subr.mxu0 0.0
    %906 = vmatpush1.msra.mxu0 0.0
    %907 = vmatprep.subr.mxu0 0.0
    %908 = vmatpush1.msra.mxu0 0.0
    %909 = vmatprep.subr.mxu0 0.0
    %910 = vmatpush1.msra.mxu0 0.0
    %911 = vmatprep.subr.mxu0 0.0
    %912 = vmatpush1.msra.mxu0 0.0
    %913 = vmatprep.subr.mxu0 0.0
    %914 = vmatpush1.msra.mxu0 0.0
    %915 = vmatprep.subr.mxu0 0.0
    %916 = vmatpush1.msra.mxu0 0.0
    %917 = vmatprep.subr.mxu0 0.0
    %918 = vmatpush1.msra.mxu0 0.0
    %919 = vmatprep.subr.mxu0 0.0
    %920 = vmatpush1.msra.mxu0 0.0
    %921 = vmatprep.subr.mxu0 0.0
    %922 = vmatpush1.msra.mxu0 0.0
    %923 = vmatprep.subr.mxu0 0.0
    %924 = vmatpush1.msra.mxu0 0.0
    %925 = vmatprep.subr.mxu0 0.0
    %926 = vmatpush1.msra.mxu0 0.0
    %927 = vmatprep.subr.mxu0 0.0
    %928 = vmatpush1.msra.mxu0 0.0
    %929 = vmatprep.subr.mxu0 0.0
    %930 = vmatpush1.msra.mxu0 0.0
    %931 = vmatprep.subr.mxu0 0.0
    %932 = vmatpush1.msra.mxu0 0.0
    %933 = vmatprep.subr.mxu0 0.0
    %934 = vmatpush1.msra.mxu0 0.0
    %935 = vmatprep.subr.mxu0 0.0
    %936 = vmatpush1.msra.mxu0 0.0
    %937 = vmatprep.mubr.f32.mxu0 0.0
    %938 = vmatmul.mubr.f32.gmra.mrb[0].mxu0 %v872
    %v939 = vpop.f32.mrb[0].mxu0
    %v940 = vadd.f32 0.0, %v939
    %v941 = vpop.f32.mrb[0].mxu0
    %942 = vdwg.mxu0
    %959 = vrot.lane.b32.xlu0 %v699, 64
    %v960 = vpop.permute.xlu0 %959
    %961 = vrot.lane.b32.xlu0 %v700, 64
    %v962 = vpop.permute.xlu0 %961
    %963 = vrot.lane.b32.xlu0 %v701, 64
    %v964 = vpop.permute.xlu0 %963
    %965 = vrot.lane.b32.xlu0 %v702, 64
    %v966 = vpop.permute.xlu0 %965
    %967 = vrot.lane.b32.xlu0 %v703, 64
    %v968 = vpop.permute.xlu0 %967
    %969 = vrot.lane.b32.xlu0 %v704, 64
    %v970 = vpop.permute.xlu0 %969
    %971 = vrot.lane.b32.xlu0 %v705, 64
    %v972 = vpop.permute.xlu0 %971
    %973 = vrot.lane.b32.xlu0 %v706, 64
    %v974 = vpop.permute.xlu0 %973
    %975 = vrot.lane.b32.xlu0 %v707, 64
    %v976 = vpop.permute.xlu0 %975
    %977 = vrot.lane.b32.xlu0 %v708, 64
    %v978 = vpop.permute.xlu0 %977
    %979 = vrot.lane.b32.xlu0 %v709, 64
    %v980 = vpop.permute.xlu0 %979
    %981 = vrot.lane.b32.xlu0 %v710, 64
    %v982 = vpop.permute.xlu0 %981
    %983 = vrot.lane.b32.xlu0 %v711, 64
    %v984 = vpop.permute.xlu0 %983
    %985 = vrot.lane.b32.xlu0 %v712, 64
    %v986 = vpop.permute.xlu0 %985
    %987 = vrot.lane.b32.xlu0 %v713, 64
    %v988 = vpop.permute.xlu0 %987
    %989 = vrot.lane.b32.xlu0 %v714, 64
    %v990 = vpop.permute.xlu0 %989
    %1007 = vmatprep.subr.mxu0 0.0
    %1008 = vmatpush1.msra.mxu0 %v960
    %1009 = vmatprep.subr.mxu0 0.0
    %1010 = vmatpush1.msra.mxu0 %v962
    %1011 = vmatprep.subr.mxu0 0.0
    %1012 = vmatpush1.msra.mxu0 %v964
    %1013 = vmatprep.subr.mxu0 0.0
    %1014 = vmatpush1.msra.mxu0 %v966
    %1015 = vmatprep.subr.mxu0 0.0
    %1016 = vmatpush1.msra.mxu0 %v968
    %1017 = vmatprep.subr.mxu0 0.0
    %1018 = vmatpush1.msra.mxu0 %v970
    %1019 = vmatprep.subr.mxu0 0.0
    %1020 = vmatpush1.msra.mxu0 %v972
    %1021 = vmatprep.subr.mxu0 0.0
    %1022 = vmatpush1.msra.mxu0 %v974
    %1023 = vmatprep.subr.mxu0 0.0
    %1024 = vmatpush1.msra.mxu0 %v976
    %1025 = vmatprep.subr.mxu0 0.0
    %1026 = vmatpush1.msra.mxu0 %v978
    %1027 = vmatprep.subr.mxu0 0.0
    %1028 = vmatpush1.msra.mxu0 %v980
    %1029 = vmatprep.subr.mxu0 0.0
    %1030 = vmatpush1.msra.mxu0 %v982
    %1031 = vmatprep.subr.mxu0 0.0
    %1032 = vmatpush1.msra.mxu0 %v984
    %1033 = vmatprep.subr.mxu0 0.0
    %1034 = vmatpush1.msra.mxu0 %v986
    %1035 = vmatprep.subr.mxu0 0.0
    %1036 = vmatpush1.msra.mxu0 %v988
    %1037 = vmatprep.subr.mxu0 0.0
    %1038 = vmatpush1.msra.mxu0 %v990
    %1039 = vmatprep.subr.mxu0 0.0
    %1040 = vmatpush1.msra.mxu0 0.0
    %1041 = vmatprep.subr.mxu0 0.0
    %1042 = vmatpush1.msra.mxu0 0.0
    %1043 = vmatprep.subr.mxu0 0.0
    %1044 = vmatpush1.msra.mxu0 0.0
    %1045 = vmatprep.subr.mxu0 0.0
    %1046 = vmatpush1.msra.mxu0 0.0
    %1047 = vmatprep.subr.mxu0 0.0
    %1048 = vmatpush1.msra.mxu0 0.0
    %1049 = vmatprep.subr.mxu0 0.0
    %1050 = vmatpush1.msra.mxu0 0.0
    %1051 = vmatprep.subr.mxu0 0.0
    %1052 = vmatpush1.msra.mxu0 0.0
    %1053 = vmatprep.subr.mxu0 0.0
    %1054 = vmatpush1.msra.mxu0 0.0
    %1055 = vmatprep.subr.mxu0 0.0
    %1056 = vmatpush1.msra.mxu0 0.0
    %1057 = vmatprep.subr.mxu0 0.0
    %1058 = vmatpush1.msra.mxu0 0.0
    %1059 = vmatprep.subr.mxu0 0.0
    %1060 = vmatpush1.msra.mxu0 0.0
    %1061 = vmatprep.subr.mxu0 0.0
    %1062 = vmatpush1.msra.mxu0 0.0
    %1063 = vmatprep.subr.mxu0 0.0
    %1064 = vmatpush1.msra.mxu0 0.0
    %1065 = vmatprep.subr.mxu0 0.0
    %1066 = vmatpush1.msra.mxu0 0.0
    %1067 = vmatprep.subr.mxu0 0.0
    %1068 = vmatpush1.msra.mxu0 0.0
    %1069 = vmatprep.subr.mxu0 0.0
    %1070 = vmatpush1.msra.mxu0 0.0
    %1071 = vmatprep.mubr.f32.mxu0 0.0
    %1072 = vmatmul.mubr.f32.gmra.mrb[0].mxu0 %v872
    %v1073 = vpop.f32.mrb[0].mxu0
    %v1074 = vadd.f32 0.0, %v1073
    %v1075 = vpop.f32.mrb[0].mxu0
    %1076 = vdwg.mxu0
    %v1077 = vrcp.pop %v940
    %v1078 = vmul.f32 %v1074, %v1077
    %v1079 = vlaneseq
    %v1080 = vshrl.u32 %v1079, 7
    %v1081 = vsub.s32 2, %v1080
    %v1082 = vrot.slane %v68, %v1081
    %v1084 = vsel %vm91, %v682, 0
    %v1087 = vsel %vm91, %v1078, 0
    %1089 = vmatprep.subr.mxu0 0.0
    %1090 = vmatpush1.msra.mxu0 %v44
    %1091 = vmatprep.subr.mxu0 0.0
    %1092 = vmatpush1.msra.mxu0 %v45
    %1093 = vmatprep.subr.mxu0 0.0
    %1094 = vmatpush1.msra.mxu0 %v46
    %1095 = vmatprep.subr.mxu0 0.0
    %1096 = vmatpush1.msra.mxu0 %v47
    %1097 = vmatprep.subr.mxu0 0.0
    %1098 = vmatpush1.msra.mxu0 0.0
    %1099 = vmatprep.subr.mxu0 0.0
    %1100 = vmatpush1.msra.mxu0 0.0
    %1101 = vmatprep.subr.mxu0 0.0
    %1102 = vmatpush1.msra.mxu0 0.0
    %1103 = vmatprep.subr.mxu0 0.0
    %1104 = vmatpush1.msra.mxu0 0.0
    %1105 = vmatprep.subr.mxu0 0.0
    %1106 = vmatpush1.msra.mxu0 0.0
    %1107 = vmatprep.subr.mxu0 0.0
    %1108 = vmatpush1.msra.mxu0 0.0
    %1109 = vmatprep.subr.mxu0 0.0
    %1110 = vmatpush1.msra.mxu0 0.0
    %1111 = vmatprep.subr.mxu0 0.0
    %1112 = vmatpush1.msra.mxu0 0.0
    %1113 = vmatprep.subr.mxu0 0.0
    %1114 = vmatpush1.msra.mxu0 0.0
    %1115 = vmatprep.subr.mxu0 0.0
    %1116 = vmatpush1.msra.mxu0 0.0
    %1117 = vmatprep.subr.mxu0 0.0
    %1118 = vmatpush1.msra.mxu0 0.0
    %1119 = vmatprep.subr.mxu0 0.0
    %1120 = vmatpush1.msra.mxu0 0.0
    %1121 = vmatprep.subr.mxu0 0.0
    %1122 = vmatpush1.msra.mxu0 0.0
    %1123 = vmatprep.subr.mxu0 0.0
    %1124 = vmatpush1.msra.mxu0 0.0
    %1125 = vmatprep.subr.mxu0 0.0
    %1126 = vmatpush1.msra.mxu0 0.0
    %1127 = vmatprep.subr.mxu0 0.0
    %1128 = vmatpush1.msra.mxu0 0.0
    %1129 = vmatprep.subr.mxu0 0.0
    %1130 = vmatpush1.msra.mxu0 0.0
    %1131 = vmatprep.subr.mxu0 0.0
    %1132 = vmatpush1.msra.mxu0 0.0
    %1133 = vmatprep.subr.mxu0 0.0
    %1134 = vmatpush1.msra.mxu0 0.0
    %1135 = vmatprep.subr.mxu0 0.0
    %1136 = vmatpush1.msra.mxu0 0.0
    %1137 = vmatprep.subr.mxu0 0.0
    %1138 = vmatpush1.msra.mxu0 0.0
    %1139 = vmatprep.subr.mxu0 0.0
    %1140 = vmatpush1.msra.mxu0 0.0
    %1141 = vmatprep.subr.mxu0 0.0
    %1142 = vmatpush1.msra.mxu0 0.0
    %1143 = vmatprep.subr.mxu0 0.0
    %1144 = vmatpush1.msra.mxu0 0.0
    %1145 = vmatprep.subr.mxu0 0.0
    %1146 = vmatpush1.msra.mxu0 0.0
    %1147 = vmatprep.subr.mxu0 0.0
    %1148 = vmatpush1.msra.mxu0 0.0
    %1149 = vmatprep.subr.mxu0 0.0
    %1150 = vmatpush1.msra.mxu0 0.0
    %1151 = vmatprep.subr.mxu0 0.0
    %1152 = vmatpush1.msra.mxu0 0.0
    %1153 = vmatprep.mubr.f32.mxu0 0.0
    %1154 = vmatmul.mubr.f32.gmra.mrb[0].mxu0 %v1084
    %v1155 = vpop.f32.mrb[0].mxu0
    %v1156 = vadd.f32 %v1082, %v1155
    %v1157 = vpop.f32.mrb[0].mxu0
    %1158 = vmatprep.mubr.f32.mxu0 0.0
    %1159 = vmatmul.mubr.f32.gmra.mrb[0].mxu0 %v1087
    %v1160 = vpop.f32.mrb[0].mxu0
    %v1161 = vadd.f32 %v1082, %v1160
    %v1162 = vpop.f32.mrb[0].mxu0
    %1163 = vdwg.mxu0
    %v1164 = vadd.f32 %v85, %v1156
    %v1165 = vadd.f32 %v86, %v1161
    %v1166 = vsel %vm91, %v1164, 0.0
    %1167 = vadd.xlane.f32.xlu0 %v1166
    %v1168 = vpop.xlane.xlu0 %1167
    %v1169 = vsel %vm91, %v1165, 0.0
    %1170 = vadd.xlane.f32.xlu0 %v1169
    %v1171 = vpop.xlane.xlu0 %1170
    %v1172 = vrcp.pop 32.0
    %v1173 = vmul.f32 %v1168, %v1172
    %v1174 = vmul.f32 %v1171, %v1172
    %v1175 = vsub.f32 %v1164, %v1173
    %v1176 = vsub.f32 %v1165, %v1174
    %v1177 = vmul.f32 %v1175, %v1175
    %v1178 = vmul.f32 %v1176, %v1176
    %v1179 = vsel %vm91, %v1177, 0.0
    %1180 = vadd.xlane.f32.xlu0 %v1179
    %v1181 = vpop.xlane.xlu0 %1180
    %v1182 = vsel %vm91, %v1178, 0.0
    %1183 = vadd.xlane.f32.xlu0 %v1182
    %v1184 = vpop.xlane.xlu0 %1183
    %v1185 = vmul.f32 %v1181, %v1172
    %v1186 = vmul.f32 %v1184, %v1172
    %v1187 = vadd.f32 %v1185, 1e-05
    %v1188 = vadd.f32 %v1186, 1e-05
    %v1189 = vrsqrt.pop %v1187
    %v1190 = vrsqrt.pop %v1188
    %v1191 = vmul.f32 %v1175, %v1189
    %v1192 = vmul.f32 %v1176, %v1190
    %v1193 = vlaneseq
    %v1194 = vshrl.u32 %v1193, 7
    %v1195 = vsub.s32 3, %v1194
    %v1196 = vrot.slane %v68, %v1195
    %v1197 = vmul.f32 %v1191, %v1196
    %v1198 = vmul.f32 %v1192, %v1196
    %v1199 = vlaneseq
    %v1200 = vshrl.u32 %v1199, 7
    %v1201 = vsub.s32 4, %v1200
    %v1202 = vrot.slane %v68, %v1201
    %v1203 = vadd.f32 %v1197, %v1202
    %v1204 = vadd.f32 %v1198, %v1202
    %v1205 = vlaneseq
    %v1206 = vshrl.u32 %v1205, 7
    %v1207 = vsub.s32 1, %v1206
    %v1208 = vrot.slane %v68, %v1207
    %v1210 = vsel %vm91, %v1203, 0
    %v1213 = vsel %vm91, %v1204, 0
    %1215 = vmatprep.subr.mxu0 0.0
    %1216 = vmatpush1.msra.mxu0 %v48
    %1217 = vmatprep.subr.mxu0 0.0
    %1218 = vmatpush1.msra.mxu0 %v49
    %1219 = vmatprep.subr.mxu0 0.0
    %1220 = vmatpush1.msra.mxu0 %v50
    %1221 = vmatprep.subr.mxu0 0.0
    %1222 = vmatpush1.msra.mxu0 %v51
    %1223 = vmatprep.subr.mxu0 0.0
    %1224 = vmatpush1.msra.mxu0 0.0
    %1225 = vmatprep.subr.mxu0 0.0
    %1226 = vmatpush1.msra.mxu0 0.0
    %1227 = vmatprep.subr.mxu0 0.0
    %1228 = vmatpush1.msra.mxu0 0.0
    %1229 = vmatprep.subr.mxu0 0.0
    %1230 = vmatpush1.msra.mxu0 0.0
    %1231 = vmatprep.subr.mxu0 0.0
    %1232 = vmatpush1.msra.mxu0 0.0
    %1233 = vmatprep.subr.mxu0 0.0
    %1234 = vmatpush1.msra.mxu0 0.0
    %1235 = vmatprep.subr.mxu0 0.0
    %1236 = vmatpush1.msra.mxu0 0.0
    %1237 = vmatprep.subr.mxu0 0.0
    %1238 = vmatpush1.msra.mxu0 0.0
    %1239 = vmatprep.subr.mxu0 0.0
    %1240 = vmatpush1.msra.mxu0 0.0
    %1241 = vmatprep.subr.mxu0 0.0
    %1242 = vmatpush1.msra.mxu0 0.0
    %1243 = vmatprep.subr.mxu0 0.0
    %1244 = vmatpush1.msra.mxu0 0.0
    %1245 = vmatprep.subr.mxu0 0.0
    %1246 = vmatpush1.msra.mxu0 0.0
    %1247 = vmatprep.subr.mxu0 0.0
    %1248 = vmatpush1.msra.mxu0 0.0
    %1249 = vmatprep.subr.mxu0 0.0
    %1250 = vmatpush1.msra.mxu0 0.0
    %1251 = vmatprep.subr.mxu0 0.0
    %1252 = vmatpush1.msra.mxu0 0.0
    %1253 = vmatprep.subr.mxu0 0.0
    %1254 = vmatpush1.msra.mxu0 0.0
    %1255 = vmatprep.subr.mxu0 0.0
    %1256 = vmatpush1.msra.mxu0 0.0
    %1257 = vmatprep.subr.mxu0 0.0
    %1258 = vmatpush1.msra.mxu0 0.0
    %1259 = vmatprep.subr.mxu0 0.0
    %1260 = vmatpush1.msra.mxu0 0.0
    %1261 = vmatprep.subr.mxu0 0.0
    %1262 = vmatpush1.msra.mxu0 0.0
    %1263 = vmatprep.subr.mxu0 0.0
    %1264 = vmatpush1.msra.mxu0 0.0
    %1265 = vmatprep.subr.mxu0 0.0
    %1266 = vmatpush1.msra.mxu0 0.0
    %1267 = vmatprep.subr.mxu0 0.0
    %1268 = vmatpush1.msra.mxu0 0.0
    %1269 = vmatprep.subr.mxu0 0.0
    %1270 = vmatpush1.msra.mxu0 0.0
    %1271 = vmatprep.subr.mxu0 0.0
    %1272 = vmatpush1.msra.mxu0 0.0
    %1273 = vmatprep.subr.mxu0 0.0
    %1274 = vmatpush1.msra.mxu0 0.0
    %1275 = vmatprep.subr.mxu0 0.0
    %1276 = vmatpush1.msra.mxu0 0.0
    %1277 = vmatprep.subr.mxu0 0.0
    %1278 = vmatpush1.msra.mxu0 0.0
    %1279 = vmatprep.mubr.f32.mxu0 0.0
    %1280 = vmatmul.mubr.f32.gmra.mrb[0].mxu0 %v1210
    %v1281 = vpop.f32.mrb[0].mxu0
    %v1282 = vadd.f32 %v1208, %v1281
    %v1283 = vpop.f32.mrb[0].mxu0
    %1284 = vmatprep.mubr.f32.mxu0 0.0
    %1285 = vmatmul.mubr.f32.gmra.mrb[0].mxu0 %v1213
    %v1286 = vpop.f32.mrb[0].mxu0
    %v1287 = vadd.f32 %v1208, %v1286
    %v1288 = vpop.f32.mrb[0].mxu0
    %1289 = vdwg.mxu0
    %v1290 = vmul.f32 %v1282, 0.5
    %v1291 = vmul.f32 %v1287, 0.5
    %v1292 = vmul.f32 %v1282, 0.70710677
    %v1293 = vmul.f32 %v1287, 0.70710677
    %v1294 = verf.f32.pop %v1292
    %v1295 = verf.f32.pop %v1293
    %v1296 = vadd.f32 %v1294, 1.0
    %v1297 = vadd.f32 %v1295, 1.0
    %v1298 = vmul.f32 %v1290, %v1296
    %v1299 = vmul.f32 %v1291, %v1297
    %v1300 = vlaneseq
    %v1301 = vshrl.u32 %v1300, 7
    %v1302 = vsub.s32 7, %v1301
    %v1303 = vrot.slane %v68, %v1302
    %1304 = vmatprep.subr.mxu0 0.0
    %1305 = vmatpush1.msra.mxu0 %v52
    %1306 = vmatprep.subr.mxu0 0.0
    %1307 = vmatpush1.msra.mxu0 %v53
    %1308 = vmatprep.subr.mxu0 0.0
    %1309 = vmatpush1.msra.mxu0 %v54
    %1310 = vmatprep.subr.mxu0 0.0
    %1311 = vmatpush1.msra.mxu0 %v55
    %1312 = vmatprep.subr.mxu0 0.0
    %1313 = vmatpush1.msra.mxu0 %v56
    %1314 = vmatprep.subr.mxu0 0.0
    %1315 = vmatpush1.msra.mxu0 %v57
    %1316 = vmatprep.subr.mxu0 0.0
    %1317 = vmatpush1.msra.mxu0 %v58
    %1318 = vmatprep.subr.mxu0 0.0
    %1319 = vmatpush1.msra.mxu0 %v59
    %1320 = vmatprep.subr.mxu0 0.0
    %1321 = vmatpush1.msra.mxu0 %v60
    %1322 = vmatprep.subr.mxu0 0.0
    %1323 = vmatpush1.msra.mxu0 %v61
    %1324 = vmatprep.subr.mxu0 0.0
    %1325 = vmatpush1.msra.mxu0 %v62
    %1326 = vmatprep.subr.mxu0 0.0
    %1327 = vmatpush1.msra.mxu0 %v63
    %1328 = vmatprep.subr.mxu0 0.0
    %1329 = vmatpush1.msra.mxu0 %v64
    %1330 = vmatprep.subr.mxu0 0.0
    %1331 = vmatpush1.msra.mxu0 %v65
    %1332 = vmatprep.subr.mxu0 0.0
    %1333 = vmatpush1.msra.mxu0 %v66
    %1334 = vmatprep.subr.mxu0 0.0
    %1335 = vmatpush1.msra.mxu0 %v67
    %1336 = vmatprep.subr.mxu0 0.0
    %1337 = vmatpush1.msra.mxu0 0.0
    %1338 = vmatprep.subr.mxu0 0.0
    %1339 = vmatpush1.msra.mxu0 0.0
    %1340 = vmatprep.subr.mxu0 0.0
    %1341 = vmatpush1.msra.mxu0 0.0
    %1342 = vmatprep.subr.mxu0 0.0
    %1343 = vmatpush1.msra.mxu0 0.0
    %1344 = vmatprep.subr.mxu0 0.0
    %1345 = vmatpush1.msra.mxu0 0.0
    %1346 = vmatprep.subr.mxu0 0.0
    %1347 = vmatpush1.msra.mxu0 0.0
    %1348 = vmatprep.subr.mxu0 0.0
    %1349 = vmatpush1.msra.mxu0 0.0
    %1350 = vmatprep.subr.mxu0 0.0
    %1351 = vmatpush1.msra.mxu0 0.0
    %1352 = vmatprep.subr.mxu0 0.0
    %1353 = vmatpush1.msra.mxu0 0.0
    %1354 = vmatprep.subr.mxu0 0.0
    %1355 = vmatpush1.msra.mxu0 0.0
    %1356 = vmatprep.subr.mxu0 0.0
    %1357 = vmatpush1.msra.mxu0 0.0
    %1358 = vmatprep.subr.mxu0 0.0
    %1359 = vmatpush1.msra.mxu0 0.0
    %1360 = vmatprep.subr.mxu0 0.0
    %1361 = vmatpush1.msra.mxu0 0.0
    %1362 = vmatprep.subr.mxu0 0.0
    %1363 = vmatpush1.msra.mxu0 0.0
    %1364 = vmatprep.subr.mxu0 0.0
    %1365 = vmatpush1.msra.mxu0 0.0
    %1366 = vmatprep.subr.mxu0 0.0
    %1367 = vmatpush1.msra.mxu0 0.0
    %1368 = vmatprep.mubr.f32.mxu0 0.0
    %1369 = vmatmul.mubr.f32.gmra.mrb[0].mxu0 %v1298
    %v1370 = vpop.f32.mrb[0].mxu0
    %v1371 = vadd.f32 %v1303, %v1370
    %v1372 = vpop.f32.mrb[0].mxu0
    %1373 = vmatprep.mubr.f32.mxu0 0.0
    %1374 = vmatmul.mubr.f32.gmra.mrb[0].mxu0 %v1299
    %v1375 = vpop.f32.mrb[0].mxu0
    %v1376 = vadd.f32 %v1303, %v1375
    %v1377 = vpop.f32.mrb[0].mxu0
    %1378 = vdwg.mxu0
    %v1379 = vadd.f32 %v1203, %v1371
    %v1380 = vadd.f32 %v1204, %v1376
    %v1381 = vsel %vm91, %v1379, 0.0
    %1382 = vadd.xlane.f32.xlu0 %v1381
    %v1383 = vpop.xlane.xlu0 %1382
    %v1384 = vsel %vm91, %v1380, 0.0
    %1385 = vadd.xlane.f32.xlu0 %v1384
    %v1386 = vpop.xlane.xlu0 %1385
    %v1387 = vmul.f32 %v1383, %v1172
    %v1388 = vmul.f32 %v1386, %v1172
    %v1389 = vsub.f32 %v1379, %v1387
    %v1390 = vsub.f32 %v1380, %v1388
    %v1391 = vmul.f32 %v1389, %v1389
    %v1392 = vmul.f32 %v1390, %v1390
    %v1393 = vsel %vm91, %v1391, 0.0
    %1394 = vadd.xlane.f32.xlu0 %v1393
    %v1395 = vpop.xlane.xlu0 %1394
    %v1396 = vsel %vm91, %v1392, 0.0
    %1397 = vadd.xlane.f32.xlu0 %v1396
    %v1398 = vpop.xlane.xlu0 %1397
    %v1399 = vmul.f32 %v1395, %v1172
    %v1400 = vmul.f32 %v1398, %v1172
    %v1401 = vadd.f32 %v1399, 1e-05
    %v1402 = vadd.f32 %v1400, 1e-05
    %v1403 = vrsqrt.pop %v1401
    %v1404 = vrsqrt.pop %v1402
    %v1405 = vmul.f32 %v1389, %v1403
    %v1406 = vmul.f32 %v1390, %v1404
    %v1407 = vlaneseq
    %v1408 = vshrl.u32 %v1407, 7
    %v1409 = vsub.s32 5, %v1408
    %v1410 = vrot.slane %v68, %v1409
    %v1411 = vmul.f32 %v1405, %v1410
    %v1412 = vmul.f32 %v1406, %v1410
    %v1413 = vlaneseq
    %v1414 = vshrl.u32 %v1413, 7
    %v1415 = vsub.s32 6, %v1414
    %v1416 = vrot.slane %v68, %v1415
    %v1417 = vadd.f32 %v1411, %v1416
    %v1418 = vadd.f32 %v1412, %v1416
    %1419 = vst.msk [vmem:[#allocation7] sm:$0xff] %vm91, %v1417
    %1420 = vst.msk [vmem:[#allocation7 + $0x8] sm:$0xff] %vm91, %v1418
    // Predicated region
    $region18: #{tpu_custom_call.1} parent=1 // pred_check
      _
    $region19: #{tpu_custom_call.1} parent=1 // pred_check_branch
      %1422 = sbr.rel (0) target = $region21
    $region20: #{tpu_custom_call.1} parent=1 // pred_region
      %s1424 = ssub.s32 256, 256
      %1425 = vsyncadd [#allocation4], %s1424
      %s1426 = sshll.u32 [#allocation7], 4
      %s1427 = int_to_ptr.vmem [resolvable:$true] %s1426
      %1432 = dma.vmem_to_hbm [thread:$0]  %s1427, 256, %s2, [#allocation4], 128, 128, 8
    $region21: #{tpu_custom_call.1} parent=1 // pred_fallthru
      _
    // Predicated region
    $region22: #{tpu_custom_call.1} parent=1 // pred_check
      _
    $region23: #{tpu_custom_call.1} parent=1 // pred_check_branch
      %1434 = sbr.rel (0) target = $region25
    $region24: #{tpu_custom_call.1} parent=1 // pred_region
      %1435 = dma.done [#allocation4], 256
    $region25: #{tpu_custom_call.1} parent=1 // pred_fallthru
      _
    %1436 = vsyncpa [#allocation3], 1
    %1437 = vsyncpa [#allocation6], 1
    %1438 = vsyncpa [#allocation4], 1

</llo_original>
